<compile_context>
chip_gen: v7x
topology: tpu7x:2x2x1
jax: 0.10.0
libtpu: 0.0.40
codegen_flags: <defaults>
</compile_context>

<pallas_src>
import functools

import jax
import jax.numpy as jnp
from jax.experimental import pallas as pl
from jax.experimental.pallas import tpu as pltpu

_LANE = 128
_PACK_LANES = 128  # lane-dense packed top-k output: [0:k]=gates f32, [k:2k]=indices (as f32)


def _round_up(v, m):
    return (v + m - 1) // m * m


def _pad2d(a, rows, cols, dtype):
    """Cast + zero-pad to (rows, cols); skips the pad copy when already aligned."""
    a = a.astype(dtype)
    r, c = a.shape
    if (r, c) == (rows, cols):
        return a
    return jnp.zeros((rows, cols), dtype).at[:r, :c].set(a)


def _gate_kernel(x_ref, w1_ref, b1_ref, w2_ref, probs_ref, packed_ref,
                 *, top_k, num_experts, approx_gelu):
    # ---- MLP gate: Linear -> GELU -> (Dropout: identity in eval) -> Linear ----
    # bf16 operands on the MXU, f32 accumulation; x arrives already bf16 (no cast here).
    x = x_ref[...]                                                         # (TB, Dp) bf16
    h = jnp.dot(x, w1_ref[...], preferred_element_type=jnp.float32)       # (TB, Hp) f32
    h = h + b1_ref[...]                                                    # (1, Hp) f32 broadcast
    # tanh-GELU runs on the EUP (idle under the MXU); exact erf is a long f32 VALU polynomial.
    h = jax.nn.gelu(h, approximate=approx_gelu)
    logits = jnp.dot(h.astype(jnp.bfloat16), w2_ref[...],
                     preferred_element_type=jnp.float32)                  # (TB, Ep) f32

    tb, e_pad = logits.shape
    col = jax.lax.broadcasted_iota(jnp.int32, (tb, e_pad), 1)
    # Padded expert columns (W2 zero-padded) -> -inf so softmax sends them to exactly 0.
    logits = jnp.where(col < num_experts, logits, jnp.float32(-1e30))

    # ---- softmax over experts (f32; reciprocal on the EUP) ----
    m = jnp.max(logits, axis=-1, keepdims=True)
    e = jnp.exp(logits - m)
    denom = jnp.sum(e, axis=-1, keepdims=True)
    probs = e * pl.reciprocal(denom, approx=True)                          # (TB, Ep) f32
    probs_ref[...] = probs.astype(probs_ref.dtype)                         # bf16 writeback

    # ---- top-k via iterative arg-max; gates + indices packed into one lane-dense f32 slab ----
    out_lanes = packed_ref.shape[-1]
    out_col = jax.lax.broadcasted_iota(jnp.int32, (tb, out_lanes), 1)
    packed = jnp.zeros((tb, out_lanes), jnp.float32)
    work = probs
    for k in range(top_k):
        mx = jnp.max(work, axis=-1, keepdims=True)                         # (TB, 1)
        # first (lowest) index on ties — matches jax.lax.top_k / torch.topk ordering
        sel = jnp.min(jnp.where(work == mx, col, e_pad), axis=-1, keepdims=True)
        packed = jnp.where(out_col == k, mx, packed)                       # gate value, f32
        packed = jnp.where(out_col == top_k + k, sel.astype(jnp.float32), packed)  # index (exact)
        work = jnp.where(col == sel, jnp.float32(-1.0), work)              # mask selected expert
    packed_ref[...] = packed                                               # single lane-dense vst


def top_k_gating_forward(x, w1, b1, w2, top_k, *, block_b=512,
                         approximate_gelu=True, trim_outputs=True):
    """Returns (top_k_indices, top_k_gates, probs) — same order as the PyTorch module.

    probs are returned in bf16 (kernel writeback traffic); gates/indices are exact f32/int32.
    Set trim_outputs=False to keep lane-dense padded probs for a downstream kernel.
    """
    B, D = x.shape
    H = w1.shape[1]
    E = w2.shape[1]
    assert top_k <= E and 2 * top_k <= _PACK_LANES

    D_pad = _round_up(D, _LANE)
    H_pad = _round_up(H, _LANE)
    E_pad = _round_up(E, _LANE)

    # bf16 x stream -> block_b must be a multiple of 16 (bf16 sublane packing).
    block_b = min(max(16, block_b), _round_up(B, 16))
    block_b = _round_up(block_b, 16)
    grid = (pl.cdiv(B, block_b),)   # no batch padding; Pallas masks the ragged boundary tile

    # Cast/pad operands (pads skipped when already aligned). x streams as bf16 (half the DMA);
    # at production sizes x should already arrive bf16 so this is a no-op.
    xp = _pad2d(x, B, D_pad, jnp.bfloat16)
    w1p = _pad2d(w1, D_pad, H_pad, jnp.bfloat16)
    b1p = _pad2d(b1.reshape(1, -1), 1, H_pad, jnp.float32)
    w2p = _pad2d(w2, H_pad, E_pad, jnp.bfloat16)

    # Explicit VMEM budget: single-buffered resident weights + double-buffered x/outputs
    # + headroom for f32 h / softmax temporaries.  Capped at v7x's 64 MiB physical VMEM.
    est = (w1p.size * 2 + b1p.size * 4 + w2p.size * 2
           + 2 * block_b * D_pad * 2
           + 2 * block_b * (E_pad * 2 + _PACK_LANES * 4)
           + 4 * block_b * H_pad * 4
           + 4 * block_b * E_pad * 4)
    vmem_limit = int(min(64 * 2 ** 20, max(32 * 2 ** 20, int(est * 1.25))))

    rows = grid[0] * block_b
    flops = 2 * rows * (D_pad * H_pad + H_pad * E_pad)
    transcendentals = rows * (H_pad + E_pad)             # gelu tanh + softmax exp
    bytes_accessed = int(xp.size * 2 + w1p.size * 2 + b1p.size * 4 + w2p.size * 2
                         + B * E_pad * 2 + B * _PACK_LANES * 4)
    cost = pl.CostEstimate(flops=flops, transcendentals=transcendentals,
                           bytes_accessed=bytes_accessed)

    kernel = functools.partial(_gate_kernel, top_k=top_k, num_experts=E,
                               approx_gelu=approximate_gelu)
    probs_p, packed = pl.pallas_call(
        kernel,
        grid=grid,
        in_specs=[
            # x tile: the only per-step streamed operand (double-buffered by default).
            pl.BlockSpec((block_b, D_pad), lambda i: (i, 0)),
            # Resident weights/bias: constant block index -> single-buffered (1x VMEM copy).
            pl.BlockSpec((D_pad, H_pad), lambda i: (0, 0), pipeline_mode=pl.Buffered(1)),
            pl.BlockSpec((1, H_pad), lambda i: (0, 0), pipeline_mode=pl.Buffered(1)),
            pl.BlockSpec((H_pad, E_pad), lambda i: (0, 0), pipeline_mode=pl.Buffered(1)),
        ],
        out_specs=(
            pl.BlockSpec((block_b, E_pad), lambda i: (i, 0)),
            pl.BlockSpec((block_b, _PACK_LANES), lambda i: (i, 0)),
        ),
        out_shape=(
            jax.ShapeDtypeStruct((B, E_pad), jnp.bfloat16),       # probs (bf16 writeback)
            jax.ShapeDtypeStruct((B, _PACK_LANES), jnp.float32),  # packed gates+indices
        ),
        compiler_params=pltpu.CompilerParams(
            dimension_semantics=("parallel",),
            vmem_limit_bytes=vmem_limit,
        ),
        cost_estimate=cost,
    )(xp, w1p, b1p, w2p)

    top_k_gates = packed[:, :top_k]
    top_k_indices = packed[:, top_k:2 * top_k].astype(jnp.int32)
    probs = probs_p[:, :E] if trim_outputs else probs_p
    return top_k_indices, top_k_gates, probs


def _reference(x, w1, b1, w2, top_k, approx_gelu=True):
    # Pure-JAX reference emulating the kernel numerics (bf16 matmul operands, same GELU mode).
    h = jnp.dot(x.astype(jnp.bfloat16), w1.astype(jnp.bfloat16),
                preferred_element_type=jnp.float32) + b1.astype(jnp.float32).reshape(1, -1)
    h = jax.nn.gelu(h, approximate=approx_gelu)
    logits = jnp.dot(h.astype(jnp.bfloat16), w2.astype(jnp.bfloat16),
                     preferred_element_type=jnp.float32)
    probs = jax.nn.softmax(logits, axis=-1)
    vals, idx = jax.lax.top_k(probs, top_k)
    return idx, vals, probs


if __name__ == "__main__":
    # Small shapes consistent with the module: x is [batch_size, input_size].
    batch, input_size, hidden_size, num_experts, top_k = 256, 64, 128, 8, 2

    key = jax.random.PRNGKey(0)
    kx, k1, kb, k2 = jax.random.split(key, 4)
    x = jax.random.normal(kx, (batch, input_size), dtype=jnp.float32)
    # Deterministic synthetic parameters (nn.Linear weights stored transposed: in x out).
    w1 = jax.random.normal(k1, (input_size, hidden_size), dtype=jnp.float32) * 0.1
    b1 = jax.random.normal(kb, (1, hidden_size), dtype=jnp.float32) * 0.1
    w2 = jax.random.normal(k2, (hidden_size, num_experts), dtype=jnp.float32) * 0.1

    # block_b=128 -> 2 even grid steps: pipelined and shardable across v7x's 2 TensorCores.
    top_k_indices, top_k_gates, probs = jax.block_until_ready(
        top_k_gating_forward(x, w1, b1, w2, top_k, block_b=128)
    )

    # Sanity check against a pure-JAX reference (tolerances cover bf16 operands/probs,
    # tanh-GELU and approx reciprocal).
    ref_idx, ref_vals, ref_probs = _reference(x, w1, b1, w2, top_k)
    assert probs.shape == (batch, num_experts)
    assert top_k_gates.shape == (batch, top_k) and top_k_indices.shape == (batch, top_k)
    assert bool(jnp.all((top_k_indices >= 0) & (top_k_indices < num_experts)))
    assert jnp.allclose(probs.astype(jnp.float32), ref_probs, atol=4e-3, rtol=2e-2)
    # gates are the k largest probs in descending order
    assert jnp.allclose(top_k_gates, ref_vals, atol=4e-3, rtol=2e-2)
    # gates are self-consistent with the probs at the selected expert indices
    gathered = jnp.take_along_axis(ref_probs, top_k_indices, axis=1)
    assert jnp.allclose(top_k_gates, gathered, atol=4e-3, rtol=2e-2)

    print("KERNEL_OK")
</pallas_src>

<mosaic_0001>
module attributes {stable_mosaic.version = 11 : i64} {
  func.func @_gate_kernel(%arg0: i32, %arg1: memref<128x128xbf16, #tpu.memory_space<vmem>>, %arg2: memref<128x128xbf16, #tpu.memory_space<vmem>>, %arg3: memref<1x128xf32, #tpu.memory_space<vmem>>, %arg4: memref<128x128xbf16, #tpu.memory_space<vmem>>, %arg5: memref<128x128xbf16, #tpu.memory_space<vmem>>, %arg6: memref<128x128xf32, #tpu.memory_space<vmem>>) attributes {dimension_semantics = [#tpu.dimension_semantics<parallel>], iteration_bounds = array<i64: 2>, scalar_prefetch = 0 : i64, scratch_operands = 0 : i64, tpu.core_type = #tpu.core_type<tc>, window_params = [{transform_indices = @transform_0, window_bounds = array<i64: 128, 128>}, {pipeline_mode = #tpu.pipeline_mode<synchronous>, transform_indices = @transform_1, window_bounds = array<i64: 128, 128>}, {pipeline_mode = #tpu.pipeline_mode<synchronous>, transform_indices = @transform_2, window_bounds = array<i64: 1, 128>}, {pipeline_mode = #tpu.pipeline_mode<synchronous>, transform_indices = @transform_3, window_bounds = array<i64: 128, 128>}, {transform_indices = @transform_4, window_bounds = array<i64: 128, 128>}, {transform_indices = @transform_5, window_bounds = array<i64: 128, 128>}]} {
    %c0 = arith.constant 0 : index
    %c0_0 = arith.constant 0 : index
    %0 = vector.load %arg1[%c0, %c0_0] : memref<128x128xbf16, #tpu.memory_space<vmem>>, vector<128x128xbf16>
    %c0_1 = arith.constant 0 : index
    %c0_2 = arith.constant 0 : index
    %1 = vector.load %arg2[%c0_1, %c0_2] : memref<128x128xbf16, #tpu.memory_space<vmem>>, vector<128x128xbf16>
    %cst = arith.constant dense<0.000000e+00> : vector<128x128xf32>
    %2 = tpu.matmul %0, %1, %cst {dimension_numbers = #tpu.dot_dimension_numbers<[1], [0], [0], [1], [0, 0, 1, 1], [], []>} : vector<128x128xbf16>, vector<128x128xbf16>, vector<128x128xf32> -> vector<128x128xf32>
    %c0_3 = arith.constant 0 : index
    %c0_4 = arith.constant 0 : index
    %3 = vector.load %arg3[%c0_3, %c0_4] : memref<1x128xf32, #tpu.memory_space<vmem>>, vector<1x128xf32>
    %4 = vector.broadcast %3 : vector<1x128xf32> to vector<128x128xf32>
    %5 = arith.addf %2, %4 : vector<128x128xf32>
    %6 = arith.mulf %5, %5 : vector<128x128xf32>
    %7 = arith.mulf %5, %6 : vector<128x128xf32>
    %cst_5 = arith.constant 4.471500e-02 : f32
    %8 = vector.broadcast %cst_5 : f32 to vector<128x128xf32>
    %9 = arith.mulf %8, %7 : vector<128x128xf32>
    %10 = arith.addf %5, %9 : vector<128x128xf32>
    %cst_6 = arith.constant 0.797884583 : f32
    %11 = vector.broadcast %cst_6 : f32 to vector<128x128xf32>
    %12 = arith.mulf %11, %10 : vector<128x128xf32>
    %13 = math.tanh %12 : vector<128x128xf32>
    %cst_7 = arith.constant 1.000000e+00 : f32
    %14 = vector.broadcast %cst_7 : f32 to vector<128x128xf32>
    %15 = arith.addf %14, %13 : vector<128x128xf32>
    %cst_8 = arith.constant 5.000000e-01 : f32
    %16 = vector.broadcast %cst_8 : f32 to vector<128x128xf32>
    %17 = arith.mulf %16, %15 : vector<128x128xf32>
    %18 = arith.mulf %5, %17 : vector<128x128xf32>
    %19 = arith.truncf %18 : vector<128x128xf32> to vector<128x128xbf16>
    %c0_9 = arith.constant 0 : index
    %c0_10 = arith.constant 0 : index
    %20 = vector.load %arg4[%c0_9, %c0_10] : memref<128x128xbf16, #tpu.memory_space<vmem>>, vector<128x128xbf16>
    %cst_11 = arith.constant dense<0.000000e+00> : vector<128x128xf32>
    %21 = tpu.matmul %19, %20, %cst_11 {dimension_numbers = #tpu.dot_dimension_numbers<[1], [0], [0], [1], [0, 0, 1, 1], [], []>} : vector<128x128xbf16>, vector<128x128xbf16>, vector<128x128xf32> -> vector<128x128xf32>
    %22 = tpu.iota {dimensions = array<i32: 1>} : vector<128x128xi32>
    %c8_i32 = arith.constant 8 : i32
    %23 = vector.broadcast %c8_i32 : i32 to vector<128x128xi32>
    %24 = arith.cmpi slt, %22, %23 : vector<128x128xi32>
    %cst_12 = arith.constant -1.000000e+30 : f32
    %25 = vector.broadcast %cst_12 : f32 to vector<128x128xf32>
    %26 = arith.select %24, %21, %25 : vector<128x128xi1>, vector<128x128xf32>
    %cst_13 = arith.constant dense<0xFF800000> : vector<128xf32>
    %27 = vector.multi_reduction <maximumf>, %26, %cst_13 [1] : vector<128x128xf32> to vector<128xf32>
    %28 = vector.shape_cast %27 : vector<128xf32> to vector<128x1xf32>
    %29 = vector.broadcast %28 : vector<128x1xf32> to vector<128x128xf32>
    %30 = arith.subf %26, %29 : vector<128x128xf32>
    %31 = math.exp %30 : vector<128x128xf32>
    %cst_14 = arith.constant dense<0.000000e+00> : vector<128xf32>
    %32 = vector.multi_reduction <add>, %31, %cst_14 [1] : vector<128x128xf32> to vector<128xf32>
    %33 = vector.shape_cast %32 : vector<128xf32> to vector<128x1xf32>
    %34 = tpu.reciprocal %33 {approx = true} : vector<128x1xf32> -> vector<128x1xf32>
    %35 = vector.broadcast %34 : vector<128x1xf32> to vector<128x128xf32>
    %36 = arith.mulf %31, %35 : vector<128x128xf32>
    %37 = arith.truncf %36 : vector<128x128xf32> to vector<128x128xbf16>
    %c0_15 = arith.constant 0 : index
    %c0_16 = arith.constant 0 : index
    %38 = vector.load %arg5[%c0_15, %c0_16] : memref<128x128xbf16, #tpu.memory_space<vmem>>, vector<128x128xbf16>
    tpu.vector_store %arg5[%c0_15, %c0_16], %37 {strides = array<i32>} : memref<128x128xbf16, #tpu.memory_space<vmem>>, vector<128x128xbf16>,
    %39 = tpu.iota {dimensions = array<i32: 1>} : vector<128x128xi32>
    %cst_17 = arith.constant 0.000000e+00 : f32
    %40 = vector.broadcast %cst_17 : f32 to vector<128x128xf32>
    %cst_18 = arith.constant dense<0xFF800000> : vector<128xf32>
    %41 = vector.multi_reduction <maximumf>, %36, %cst_18 [1] : vector<128x128xf32> to vector<128xf32>
    %42 = vector.shape_cast %41 : vector<128xf32> to vector<128x1xf32>
    %43 = vector.broadcast %42 : vector<128x1xf32> to vector<128x128xf32>
    %44 = arith.cmpf oeq, %36, %43 : vector<128x128xf32>
    %c128_i32 = arith.constant 128 : i32
    %45 = vector.broadcast %c128_i32 : i32 to vector<128x128xi32>
    %46 = arith.select %44, %22, %45 : vector<128x128xi1>, vector<128x128xi32>
    %cst_19 = arith.constant dense<2147483647> : vector<128xi32>
    %47 = vector.multi_reduction <minsi>, %46, %cst_19 [1] : vector<128x128xi32> to vector<128xi32>
    %48 = vector.shape_cast %47 : vector<128xi32> to vector<128x1xi32>
    %c0_i32 = arith.constant 0 : i32
    %49 = vector.broadcast %c0_i32 : i32 to vector<128x128xi32>
    %50 = arith.cmpi eq, %39, %49 : vector<128x128xi32>
    %51 = vector.shape_cast %42 : vector<128x1xf32> to vector<128x1xf32>
    %52 = vector.broadcast %51 : vector<128x1xf32> to vector<128x128xf32>
    %53 = arith.select %50, %52, %40 : vector<128x128xi1>, vector<128x128xf32>
    %c2_i32 = arith.constant 2 : i32
    %54 = vector.broadcast %c2_i32 : i32 to vector<128x128xi32>
    %55 = arith.cmpi eq, %39, %54 : vector<128x128xi32>
    %56 = arith.sitofp %48 : vector<128x1xi32> to vector<128x1xf32>
    %57 = vector.shape_cast %56 : vector<128x1xf32> to vector<128x1xf32>
    %58 = vector.broadcast %57 : vector<128x1xf32> to vector<128x128xf32>
    %59 = arith.select %55, %58, %53 : vector<128x128xi1>, vector<128x128xf32>
    %60 = vector.broadcast %48 : vector<128x1xi32> to vector<128x128xi32>
    %61 = arith.cmpi eq, %22, %60 : vector<128x128xi32>
    %cst_20 = arith.constant -1.000000e+00 : f32
    %62 = vector.broadcast %cst_20 : f32 to vector<128x128xf32>
    %63 = arith.select %61, %62, %36 : vector<128x128xi1>, vector<128x128xf32>
    %cst_21 = arith.constant dense<0xFF800000> : vector<128xf32>
    %64 = vector.multi_reduction <maximumf>, %63, %cst_21 [1] : vector<128x128xf32> to vector<128xf32>
    %65 = vector.shape_cast %64 : vector<128xf32> to vector<128x1xf32>
    %66 = vector.broadcast %65 : vector<128x1xf32> to vector<128x128xf32>
    %67 = arith.cmpf oeq, %63, %66 : vector<128x128xf32>
    %c128_i32_22 = arith.constant 128 : i32
    %68 = vector.broadcast %c128_i32_22 : i32 to vector<128x128xi32>
    %69 = arith.select %67, %22, %68 : vector<128x128xi1>, vector<128x128xi32>
    %cst_23 = arith.constant dense<2147483647> : vector<128xi32>
    %70 = vector.multi_reduction <minsi>, %69, %cst_23 [1] : vector<128x128xi32> to vector<128xi32>
    %71 = vector.shape_cast %70 : vector<128xi32> to vector<128x1xi32>
    %c1_i32 = arith.constant 1 : i32
    %72 = vector.broadcast %c1_i32 : i32 to vector<128x128xi32>
    %73 = arith.cmpi eq, %39, %72 : vector<128x128xi32>
    %74 = vector.shape_cast %65 : vector<128x1xf32> to vector<128x1xf32>
    %75 = vector.broadcast %74 : vector<128x1xf32> to vector<128x128xf32>
    %76 = arith.select %73, %75, %59 : vector<128x128xi1>, vector<128x128xf32>
    %c3_i32 = arith.constant 3 : i32
    %77 = vector.broadcast %c3_i32 : i32 to vector<128x128xi32>
    %78 = arith.cmpi eq, %39, %77 : vector<128x128xi32>
    %79 = arith.sitofp %71 : vector<128x1xi32> to vector<128x1xf32>
    %80 = vector.shape_cast %79 : vector<128x1xf32> to vector<128x1xf32>
    %81 = vector.broadcast %80 : vector<128x1xf32> to vector<128x128xf32>
    %82 = arith.select %78, %81, %76 : vector<128x128xi1>, vector<128x128xf32>
    %c0_24 = arith.constant 0 : index
    %c0_25 = arith.constant 0 : index
    %83 = vector.load %arg6[%c0_24, %c0_25] : memref<128x128xf32, #tpu.memory_space<vmem>>, vector<128x128xf32>
    tpu.vector_store %arg6[%c0_24, %c0_25], %82 {strides = array<i32>} : memref<128x128xf32, #tpu.memory_space<vmem>>, vector<128x128xf32>,
    return
  }
  func.func @transform_0(%arg0: i32) -> (i32, i32) {
    %c0_i32 = arith.constant 0 : i32
    %c0_i32_0 = arith.constant 0 : i32
    return %arg0, %c0_i32 : i32, i32
  }
  func.func @transform_1(%arg0: i32) -> (i32, i32) {
    %c0_i32 = arith.constant 0 : i32
    %c0_i32_0 = arith.constant 0 : i32
    %c0_i32_1 = arith.constant 0 : i32
    return %c0_i32, %c0_i32_0 : i32, i32
  }
  func.func @transform_2(%arg0: i32) -> (i32, i32) {
    %c0_i32 = arith.constant 0 : i32
    %c0_i32_0 = arith.constant 0 : i32
    %c0_i32_1 = arith.constant 0 : i32
    return %c0_i32, %c0_i32_0 : i32, i32
  }
  func.func @transform_3(%arg0: i32) -> (i32, i32) {
    %c0_i32 = arith.constant 0 : i32
    %c0_i32_0 = arith.constant 0 : i32
    %c0_i32_1 = arith.constant 0 : i32
    return %c0_i32, %c0_i32_0 : i32, i32
  }
  func.func @transform_4(%arg0: i32) -> (i32, i32) {
    %c0_i32 = arith.constant 0 : i32
    %c0_i32_0 = arith.constant 0 : i32
    return %arg0, %c0_i32 : i32, i32
  }
  func.func @transform_5(%arg0: i32) -> (i32, i32) {
    %c0_i32 = arith.constant 0 : i32
    %c0_i32_0 = arith.constant 0 : i32
    return %arg0, %c0_i32 : i32, i32
  }
}

</mosaic_0001>

<llo_original>
// kernel: tpu_custom_call.1
$region0: #{tpu_custom_call.1}
  #allocation0 [shape = 'u32[]', space=smem, size = 0x4, offset = 0x4, fixed_abs, tag = 'smem constant byte address 0x4 - core index']
  #allocation1 [shape = 'u32[144,128]{1,0:T(1,128)}', space=vmem, size = 0x12000, scoped, tag = 'internal scratch']
  %s0 = inlined_call_operand.hbm [shape: bf16[256,128], index: 0, kind: input, shape index: {}]
  %s1 = inlined_call_operand.hbm [shape: bf16[128,128], index: 1, kind: input, shape index: {}]
  %s2 = inlined_call_operand.vmem [shape: f32[1,128], index: 2, kind: input, shape index: {}]
  %s3 = inlined_call_operand.hbm [shape: bf16[128,128], index: 3, kind: input, shape index: {}]
  %s4 = inlined_call_operand.hbm [shape: bf16[256,128], index: 4, kind: output, shape index: {0}]
  %s5 = inlined_call_operand.hbm [shape: f32[256,128], index: 5, kind: output, shape index: {1}]
  %6 = xla_tuple %s4, %s5
  %s7 = sld [smem:[#allocation0]]
  $region69: #{tpu_custom_call.1} parent=0
    _
  %s9 = ssub.s32 1, %s7
  %s10 = scalar_select 0, %s9, %s7
  $region1: #{tpu_custom_call.1} parent=0
    #allocation2 [shape = 'u8[65536]{0}', space=vmem, size = 0x10000, scoped, tag = 'input window, operand 0']
    #allocation3 [shape = 's32[2]{0}', space=sflag, size = 0x8, scoped, tag = 'scoped memory for tpu_custom_call.1']
    #allocation4 [shape = 's32[2]{0}', space=sflag, size = 0x8, scoped, tag = 'scoped memory for tpu_custom_call.1']
    #allocation5 [shape = 'u8[32768]{0}', space=vmem, size = 0x8000, scoped, tag = 'input window, operand 1, single buffered']
    #allocation6 [shape = 's32[1]{0}', space=sflag, size = 0x4, scoped, tag = 'scoped memory for tpu_custom_call.1']
    #allocation7 [shape = 'u8[32768]{0}', space=vmem, size = 0x8000, scoped, tag = 'input window, operand 3, single buffered']
    #allocation8 [shape = 'u8[65536]{0}', space=vmem, size = 0x10000, scoped, tag = 'output window, operand 0']
    #allocation9 [shape = 'u8[131072]{0}', space=vmem, size = 0x20000, scoped, tag = 'output window, operand 1']
    #allocation10 [shape = 's32[2]{0}', space=sflag, size = 0x8, scoped, tag = 'scoped memory for tpu_custom_call.1']
    %11 = vsyncpa [#allocation3], 0
    %s12 = scalar_lea.sflag [#allocation3], 1
    %13 = vsyncpa %s12, 0
    %14 = vsyncpa [#allocation6], 0
    %15 = vsyncpa [#allocation4], 0
    %s16 = scalar_lea.sflag [#allocation4], 1
    %17 = vsyncpa %s16, 0
    %18 = vsyncpa [#allocation10], 0
    %s19 = scalar_lea.sflag [#allocation10], 1
    %20 = vsyncpa %s19, 0
    loop: start=0, step=1, limit=4
    $region2: #{tpu_custom_call.1} parent=1 // loop_pre_header
      _
    $region3: #{tpu_custom_call.1} parent=1 // loop_header
      %s22 = sphi 0, %s26
      %p23 = scmp.ge.s32.totalorder %s22, 4
      %s32 = sphi 0, %s34
      %s35 = sphi 0, %s32
      %s36 = sphi 0, %s35
      %s52 = sphi 0, %s36
      %s56 = sphi 0, %s56
      %s58 = sphi 0, %s56
      %s59 = sphi 0, %s58
      %s73 = sphi 0, %s59
      %s77 = sphi 0, %s77
      %s79 = sphi 0, %s77
      %s80 = sphi 0, %s79
      %s94 = sphi 0, %s80
      %s98 = sphi 0, %s98
      %s100 = sphi 0, %s98
      %s101 = sphi 0, %s100
      %s115 = sphi 0, %s101
      %s121 = sphi 0, %s123
      %s124 = sphi 0, %s121
      %s125 = sphi 0, %s124
      %s141 = sphi 0, %s125
      %s147 = sphi 0, %s149
      %s150 = sphi 0, %s147
      %s151 = sphi 0, %s150
      %s167 = sphi 0, %s151
    $region4: #{tpu_custom_call.1} parent=1 // loop_header_branch
      %25 = sbr.rel (%p23) target = $region8
    $region5: #{tpu_custom_call.1} parent=1 // loop_body
      %s27 = ssub.s32 %s22, 1
      %s28 = ssub.s32 %s22, 2
      %s29 = sadd.s32 %s22, 1
      %s30 = ssub.s32 %s22, %s29
      %p31 = scmp.eq.s32.totalorder %s30, 0
      %s33 = sadd.s32 %s32, 1
      %s34 = scalar_select %p31, %s32, %s33
      %p37 = pneg %p31
      %p38 = scmp.eq.s32.totalorder %s22, 1
      %p39 = por %p37, %p38
      %p40 = scmp.ne.s32.totalorder %s32, %s35
      %p41 = scmp.eq.s32.totalorder %s22, 0
      %p42 = por %p40, %p41
      %p43 = scmp.ne.s32.totalorder %s32, %s35
      %p44 = scmp.eq.s32.totalorder %s27, 1
      %p45 = por %p43, %p44
      %p46 = scmp.ne.s32.totalorder %s35, %s36
      %p47 = scmp.eq.s32.totalorder %s27, 0
      %p48 = por %p46, %p47
      %p49 = scmp.ne.s32.totalorder %s35, %s36
      %p50 = scmp.eq.s32.totalorder %s28, 1
      %p51 = por %p49, %p50
      %p53 = scmp.ne.s32.totalorder %s36, %s52
      %p54 = scmp.eq.s32.totalorder %s28, 0
      %p55 = por %p53, %p54
      %s57 = sadd.s32 %s56, 1
      %p60 = scmp.eq.s32.totalorder %s22, 1
      %p61 = scmp.ne.s32.totalorder %s56, %s58
      %p62 = scmp.eq.s32.totalorder %s22, 0
      %p63 = por %p61, %p62
      %p64 = scmp.ne.s32.totalorder %s56, %s58
      %p65 = scmp.eq.s32.totalorder %s27, 1
      %p66 = por %p64, %p65
      %p67 = scmp.ne.s32.totalorder %s58, %s59
      %p68 = scmp.eq.s32.totalorder %s27, 0
      %p69 = por %p67, %p68
      %p70 = scmp.ne.s32.totalorder %s58, %s59
      %p71 = scmp.eq.s32.totalorder %s28, 1
      %p72 = por %p70, %p71
      %p74 = scmp.ne.s32.totalorder %s59, %s73
      %p75 = scmp.eq.s32.totalorder %s28, 0
      %p76 = por %p74, %p75
      %s78 = sadd.s32 %s77, 1
      %p81 = scmp.eq.s32.totalorder %s22, 1
      %p82 = scmp.ne.s32.totalorder %s77, %s79
      %p83 = scmp.eq.s32.totalorder %s22, 0
      %p84 = por %p82, %p83
      %p85 = scmp.ne.s32.totalorder %s77, %s79
      %p86 = scmp.eq.s32.totalorder %s27, 1
      %p87 = por %p85, %p86
      %p88 = scmp.ne.s32.totalorder %s79, %s80
      %p89 = scmp.eq.s32.totalorder %s27, 0
      %p90 = por %p88, %p89
      %p91 = scmp.ne.s32.totalorder %s79, %s80
      %p92 = scmp.eq.s32.totalorder %s28, 1
      %p93 = por %p91, %p92
      %p95 = scmp.ne.s32.totalorder %s80, %s94
      %p96 = scmp.eq.s32.totalorder %s28, 0
      %p97 = por %p95, %p96
      %s99 = sadd.s32 %s98, 1
      %p102 = scmp.eq.s32.totalorder %s22, 1
      %p103 = scmp.ne.s32.totalorder %s98, %s100
      %p104 = scmp.eq.s32.totalorder %s22, 0
      %p105 = por %p103, %p104
      %p106 = scmp.ne.s32.totalorder %s98, %s100
      %p107 = scmp.eq.s32.totalorder %s27, 1
      %p108 = por %p106, %p107
      %p109 = scmp.ne.s32.totalorder %s100, %s101
      %p110 = scmp.eq.s32.totalorder %s27, 0
      %p111 = por %p109, %p110
      %p112 = scmp.ne.s32.totalorder %s100, %s101
      %p113 = scmp.eq.s32.totalorder %s28, 1
      %p114 = por %p112, %p113
      %p116 = scmp.ne.s32.totalorder %s101, %s115
      %p117 = scmp.eq.s32.totalorder %s28, 0
      %p118 = por %p116, %p117
      %s119 = ssub.s32 %s22, %s29
      %p120 = scmp.eq.s32.totalorder %s119, 0
      %s122 = sadd.s32 %s121, 1
      %s123 = scalar_select %p120, %s121, %s122
      %p126 = pneg %p120
      %p127 = scmp.eq.s32.totalorder %s22, 1
      %p128 = por %p126, %p127
      %p129 = scmp.ne.s32.totalorder %s121, %s124
      %p130 = scmp.eq.s32.totalorder %s22, 0
      %p131 = por %p129, %p130
      %p132 = scmp.ne.s32.totalorder %s121, %s124
      %p133 = scmp.eq.s32.totalorder %s27, 1
      %p134 = por %p132, %p133
      %p135 = scmp.ne.s32.totalorder %s124, %s125
      %p136 = scmp.eq.s32.totalorder %s27, 0
      %p137 = por %p135, %p136
      %p138 = scmp.ne.s32.totalorder %s124, %s125
      %p139 = scmp.eq.s32.totalorder %s28, 1
      %p140 = por %p138, %p139
      %p142 = scmp.ne.s32.totalorder %s125, %s141
      %p143 = scmp.eq.s32.totalorder %s28, 0
      %p144 = por %p142, %p143
      %s145 = ssub.s32 %s22, %s29
      %p146 = scmp.eq.s32.totalorder %s145, 0
      %s148 = sadd.s32 %s147, 1
      %s149 = scalar_select %p146, %s147, %s148
      %p152 = pneg %p146
      %p153 = scmp.eq.s32.totalorder %s22, 1
      %p154 = por %p152, %p153
      %p155 = scmp.ne.s32.totalorder %s147, %s150
      %p156 = scmp.eq.s32.totalorder %s22, 0
      %p157 = por %p155, %p156
      %p158 = scmp.ne.s32.totalorder %s147, %s150
      %p159 = scmp.eq.s32.totalorder %s27, 1
      %p160 = por %p158, %p159
      %p161 = scmp.ne.s32.totalorder %s150, %s151
      %p162 = scmp.eq.s32.totalorder %s27, 0
      %p163 = por %p161, %p162
      %p164 = scmp.ne.s32.totalorder %s150, %s151
      %p165 = scmp.eq.s32.totalorder %s28, 1
      %p166 = por %p164, %p165
      %p168 = scmp.ne.s32.totalorder %s151, %s167
      %p169 = scmp.eq.s32.totalorder %s28, 0
      %p170 = por %p168, %p169
      %p171 = scmp.le.s32.totalorder 1, %s22
      %p172 = scmp.lt.s32.totalorder %s22, 3
      %p173 = pnand %p171, %p172
      %p174 = pneg %p173
      // Predicated region
      $region9: #{tpu_custom_call.1} parent=5 // pred_check
        _
      $region10: #{tpu_custom_call.1} parent=5 // pred_check_branch
        %176 = sbr.rel (%p173) target = $region12
      $region11: #{tpu_custom_call.1} parent=5 // pred_region
        %s177 = ssub.s32 %s22, 1
        // Predicated region
        $region13: #{tpu_custom_call.1} parent=11 // pred_check
          %p178 = pneg %p69
        $region14: #{tpu_custom_call.1} parent=11 // pred_check_branch
          %180 = sbr.rel (%p178) target = $region16
        $region15: #{tpu_custom_call.1} parent=11 // pred_region
          %s182 = ssub.s32 1024, 1024
          %183 = vsyncadd [#allocation6], %s182
          %s184 = sshll.u32 [#allocation5], 4
          %s185 = int_to_ptr.vmem [resolvable:$true] %s184
          %190 = dma.hbm_to_vmem [thread:$0]  %s1, 1024, %s185, [#allocation6], 64, 64, 4
        $region16: #{tpu_custom_call.1} parent=11 // pred_fallthru
          _
        // Predicated region
        $region17: #{tpu_custom_call.1} parent=11 // pred_check
          %p191 = pneg %p90
        $region18: #{tpu_custom_call.1} parent=11 // pred_check_branch
          %193 = sbr.rel (%p191) target = $region20
        $region19: #{tpu_custom_call.1} parent=11 // pred_region
          _
        $region20: #{tpu_custom_call.1} parent=11 // pred_fallthru
          _
        // Predicated region
        $region21: #{tpu_custom_call.1} parent=11 // pred_check
          %p194 = pneg %p111
        $region22: #{tpu_custom_call.1} parent=11 // pred_check_branch
          %196 = sbr.rel (%p194) target = $region24
        $region23: #{tpu_custom_call.1} parent=11 // pred_region
          %s198 = ssub.s32 1024, 1024
          %199 = vsyncadd [#allocation6], %s198
          %s200 = sshll.u32 [#allocation7], 4
          %s201 = int_to_ptr.vmem [resolvable:$true] %s200
          %206 = dma.hbm_to_vmem [thread:$0]  %s3, 1024, %s201, [#allocation6], 64, 64, 4
        $region24: #{tpu_custom_call.1} parent=11 // pred_fallthru
          _
      $region12: #{tpu_custom_call.1} parent=5 // pred_fallthru
        _
      %p207 = scmp.lt.s32.totalorder %s22, 2
      // Predicated region
      $region25: #{tpu_custom_call.1} parent=5 // pred_check
        %p208 = pneg %p207
      $region26: #{tpu_custom_call.1} parent=5 // pred_check_branch
        %210 = sbr.rel (%p208) target = $region28
      $region27: #{tpu_custom_call.1} parent=5 // pred_region
        // Predicated region
        $region29: #{tpu_custom_call.1} parent=27 // pred_check
          %p211 = pneg %p42
        $region30: #{tpu_custom_call.1} parent=27 // pred_check_branch
          %213 = sbr.rel (%p211) target = $region32
        $region31: #{tpu_custom_call.1} parent=27 // pred_region
          %s214 = sand.u32 %s32, 1
          %s215 = scalar_lea.sflag [#allocation3], %s214
          %s216 = sand.u32 %s32, 1
          %s217 = smul.addr %s216, 64
          %s218 = scalar_lea.vmem [#allocation2], %s217
          %s219 = smul.u32 16, %s22
          %s221 = ssub.s32 1024, 1024
          %222 = vsyncadd %s215, %s221
          %s223 = smul.addr %s219, 64
          %s224 = scalar_lea.hbm %s0, %s223
          %s225 = sshll.u32 %s218, 4
          %s226 = int_to_ptr.vmem [resolvable:$true] %s225
          %231 = dma.hbm_to_vmem [thread:$0]  %s224, 1024, %s226, %s215, 64, 64, 4
        $region32: #{tpu_custom_call.1} parent=27 // pred_fallthru
          _
      $region28: #{tpu_custom_call.1} parent=5 // pred_fallthru
        _
      %p232 = scmp.le.s32.totalorder 1, %s22
      %p233 = scmp.lt.s32.totalorder %s22, 3
      %p234 = pnand %p232, %p233
      %p235 = pneg %p234
      // Predicated region
      $region33: #{tpu_custom_call.1} parent=5 // pred_check
        _
      $region34: #{tpu_custom_call.1} parent=5 // pred_check_branch
        %237 = sbr.rel (%p234) target = $region36
      $region35: #{tpu_custom_call.1} parent=5 // pred_region
        %s238 = ssub.s32 %s22, 1
        %s239 = sand.u32 %s35, 1
        %s240 = scalar_lea.sflag [#allocation3], %s239
        %s241 = sand.u32 %s35, 1
        %s242 = smul.addr %s241, 64
        %s243 = scalar_lea.vmem [#allocation2], %s242
        // Predicated region
        $region37: #{tpu_custom_call.1} parent=35 // pred_check
          %p244 = pneg %p48
        $region38: #{tpu_custom_call.1} parent=35 // pred_check_branch
          %246 = sbr.rel (%p244) target = $region40
        $region39: #{tpu_custom_call.1} parent=35 // pred_region
          %247 = dma.done %s240, 1024
        $region40: #{tpu_custom_call.1} parent=35 // pred_fallthru
          _
        // Predicated region
        $region41: #{tpu_custom_call.1} parent=35 // pred_check
          %p248 = pneg %p69
        $region42: #{tpu_custom_call.1} parent=35 // pred_check_branch
          %250 = sbr.rel (%p248) target = $region44
        $region43: #{tpu_custom_call.1} parent=35 // pred_region
          %251 = dma.done [#allocation6], 1024
        $region44: #{tpu_custom_call.1} parent=35 // pred_fallthru
          _
        // Predicated region
        $region45: #{tpu_custom_call.1} parent=35 // pred_check
          %p252 = pneg %p111
        $region46: #{tpu_custom_call.1} parent=35 // pred_check_branch
          %254 = sbr.rel (%p252) target = $region48
        $region47: #{tpu_custom_call.1} parent=35 // pred_region
          %255 = dma.done [#allocation6], 1024
        $region48: #{tpu_custom_call.1} parent=35 // pred_fallthru
          _
        %s256 = sand.u32 %s35, 1
        %s257 = scalar_lea.sflag [#allocation3], %s256
        %s258 = sand.u32 %s35, 1
        %s259 = smul.addr %s258, 64
        %s260 = scalar_lea.vmem [#allocation2], %s259
        %p261 = pneg %p48
        %p262 = pneg %p45
        %p263 = pneg %p69
        %p264 = pneg %p66
        %p265 = pneg %p90
        %p266 = pneg %p87
        %p267 = pneg %p111
        %p268 = pneg %p108
        %p269 = pneg %p137
        %p270 = pneg %p134
        %s271 = sand.u32 %s124, 1
        %s272 = scalar_lea.sflag [#allocation4], %s271
        %s273 = sand.u32 %s124, 1
        %s274 = smul.addr %s273, 64
        %s275 = scalar_lea.vmem [#allocation8], %s274
        %p276 = pneg %p163
        %p277 = pneg %p160
        %s278 = sand.u32 %s150, 1
        %s279 = scalar_lea.sflag [#allocation10], %s278
        %s280 = sand.u32 %s150, 1
        %s281 = smul.addr %s280, 128
        %s282 = scalar_lea.vmem [#allocation9], %s281
        %s283 = smul.u32 16, %s27
        %s284 = smul.u32 16, %s27
        %s285 = smul.u32 16, %s27
        %v287 = vld [vmem:[%s243] sm:$0xf]
        %v288 = vld [vmem:[%s243 + $0x4] sm:$0xf]
        %v289 = vld [vmem:[%s243 + $0x8] sm:$0xf]
        %v290 = vld [vmem:[%s243 + $0xc] sm:$0xf]
        %v291 = vld [vmem:[%s243 + $0x10] sm:$0xf]
        %v292 = vld [vmem:[%s243 + $0x14] sm:$0xf]
        %v293 = vld [vmem:[%s243 + $0x18] sm:$0xf]
        %v294 = vld [vmem:[%s243 + $0x1c] sm:$0xf]
        %v295 = vld [vmem:[%s243 + $0x20] sm:$0xf]
        %v296 = vld [vmem:[%s243 + $0x24] sm:$0xf]
        %v297 = vld [vmem:[%s243 + $0x28] sm:$0xf]
        %v298 = vld [vmem:[%s243 + $0x2c] sm:$0xf]
        %v299 = vld [vmem:[%s243 + $0x30] sm:$0xf]
        %v300 = vld [vmem:[%s243 + $0x34] sm:$0xf]
        %v301 = vld [vmem:[%s243 + $0x38] sm:$0xf]
        %v302 = vld [vmem:[%s243 + $0x3c] sm:$0xf]
        %v303 = vld [vmem:[#allocation5] sm:$0xf]
        %v304 = vld [vmem:[#allocation5 + $0x4] sm:$0xf]
        %v305 = vld [vmem:[#allocation5 + $0x8] sm:$0xf]
        %v306 = vld [vmem:[#allocation5 + $0xc] sm:$0xf]
        %v307 = vld [vmem:[#allocation5 + $0x10] sm:$0xf]
        %v308 = vld [vmem:[#allocation5 + $0x14] sm:$0xf]
        %v309 = vld [vmem:[#allocation5 + $0x18] sm:$0xf]
        %v310 = vld [vmem:[#allocation5 + $0x1c] sm:$0xf]
        %v311 = vld [vmem:[#allocation5 + $0x20] sm:$0xf]
        %v312 = vld [vmem:[#allocation5 + $0x24] sm:$0xf]
        %v313 = vld [vmem:[#allocation5 + $0x28] sm:$0xf]
        %v314 = vld [vmem:[#allocation5 + $0x2c] sm:$0xf]
        %v315 = vld [vmem:[#allocation5 + $0x30] sm:$0xf]
        %v316 = vld [vmem:[#allocation5 + $0x34] sm:$0xf]
        %v317 = vld [vmem:[#allocation5 + $0x38] sm:$0xf]
        %v318 = vld [vmem:[#allocation5 + $0x3c] sm:$0xf]
        %v319 = vld [vmem:[%s2] sm:$0x1]
        %v321 = vlaneseq
        %v322 = vshrl.u32 %v321, 7
        %v323 = vsub.s32 0, %v322
        %v324 = vrot.slane %v319, %v323
        %v342 = vunpack.c.l.b16 %v287
        %v343 = vunpack.c.l.b16 %v288
        %v344 = vunpack.c.l.b16 %v289
        %v345 = vunpack.c.l.b16 %v290
        %v346 = vunpack.c.l.b16 %v291
        %v347 = vunpack.c.l.b16 %v292
        %v348 = vunpack.c.l.b16 %v293
        %v349 = vunpack.c.l.b16 %v294
        %v350 = vunpack.c.l.b16 %v295
        %v351 = vunpack.c.l.b16 %v296
        %v352 = vunpack.c.l.b16 %v297
        %v353 = vunpack.c.l.b16 %v298
        %v354 = vunpack.c.l.b16 %v299
        %v355 = vunpack.c.l.b16 %v300
        %v356 = vunpack.c.l.b16 %v301
        %v357 = vunpack.c.l.b16 %v302
        %v358 = vpack.c.b16 %v343, %v342
        %v359 = vpack.c.b16 %v345, %v344
        %v360 = vpack.c.b16 %v347, %v346
        %v361 = vpack.c.b16 %v349, %v348
        %v362 = vpack.c.b16 %v351, %v350
        %v363 = vpack.c.b16 %v353, %v352
        %v364 = vpack.c.b16 %v355, %v354
        %v365 = vpack.c.b16 %v357, %v356
        %v390 = vunpack.c.l.b16 %v303
        %v391 = vunpack.c.l.b16 %v304
        %v392 = vunpack.c.l.b16 %v305
        %v393 = vunpack.c.l.b16 %v306
        %v394 = vunpack.c.l.b16 %v307
        %v395 = vunpack.c.l.b16 %v308
        %v396 = vunpack.c.l.b16 %v309
        %v397 = vunpack.c.l.b16 %v310
        %v398 = vunpack.c.l.b16 %v311
        %v399 = vunpack.c.l.b16 %v312
        %v400 = vunpack.c.l.b16 %v313
        %v401 = vunpack.c.l.b16 %v314
        %v402 = vunpack.c.l.b16 %v315
        %v403 = vunpack.c.l.b16 %v316
        %v404 = vunpack.c.l.b16 %v317
        %v405 = vunpack.c.l.b16 %v318
        %v406 = vpack.c.b16 %v391, %v390
        %v407 = vpack.c.b16 %v393, %v392
        %v408 = vpack.c.b16 %v395, %v394
        %v409 = vpack.c.b16 %v397, %v396
        %v410 = vpack.c.b16 %v399, %v398
        %v411 = vpack.c.b16 %v401, %v400
        %v412 = vpack.c.b16 %v403, %v402
        %v413 = vpack.c.b16 %v405, %v404
        %422 = vmatprep.subr.bf16.mxu0 0
        %423 = vmatpush1.bf16.msra.mxu0 %v406
        %424 = vmatprep.subr.bf16.mxu0 0
        %425 = vmatpush1.bf16.msra.mxu0 %v407
        %426 = vmatprep.subr.bf16.mxu0 0
        %427 = vmatpush1.bf16.msra.mxu0 %v408
        %428 = vmatprep.subr.bf16.mxu0 0
        %429 = vmatpush1.bf16.msra.mxu0 %v409
        %430 = vmatprep.subr.bf16.mxu0 0
        %431 = vmatpush1.bf16.msra.mxu0 %v410
        %432 = vmatprep.subr.bf16.mxu0 0
        %433 = vmatpush1.bf16.msra.mxu0 %v411
        %434 = vmatprep.subr.bf16.mxu0 0
        %435 = vmatpush1.bf16.msra.mxu0 %v412
        %436 = vmatprep.subr.bf16.mxu0 0
        %437 = vmatpush1.bf16.msra.mxu0 %v413
        %438 = vmatprep.subr.bf16.mxu0 0
        %439 = vmatpush1.bf16.msra.mxu0 0
        %440 = vmatprep.subr.bf16.mxu0 0
        %441 = vmatpush1.bf16.msra.mxu0 0
        %442 = vmatprep.subr.bf16.mxu0 0
        %443 = vmatpush1.bf16.msra.mxu0 0
        %444 = vmatprep.subr.bf16.mxu0 0
        %445 = vmatpush1.bf16.msra.mxu0 0
        %446 = vmatprep.subr.bf16.mxu0 0
        %447 = vmatpush1.bf16.msra.mxu0 0
        %448 = vmatprep.subr.bf16.mxu0 0
        %449 = vmatpush1.bf16.msra.mxu0 0
        %450 = vmatprep.subr.bf16.mxu0 0
        %451 = vmatpush1.bf16.msra.mxu0 0
        %452 = vmatprep.subr.bf16.mxu0 0
        %453 = vmatpush1.bf16.msra.mxu0 0
        %454 = vmatprep.mubr.bf16.mxu0 0
        %455 = vmatmul.mubr.bf16.gmra.mrb[0].mxu0 %v358
        %v456 = vpop.f32.mrb[0].mxu0
        %v457 = vadd.f32 %v324, %v456
        %v458 = vpop.f32.mrb[0].mxu0
        %v459 = vpop.f32.mrb[0].mxu0
        %v460 = vadd.f32 %v324, %v459
        %v461 = vpop.f32.mrb[0].mxu0
        %462 = vmatprep.mubr.bf16.mxu0 0
        %463 = vmatmul.mubr.bf16.gmra.mrb[0].mxu0 %v359
        %v464 = vpop.f32.mrb[0].mxu0
        %v465 = vadd.f32 %v324, %v464
        %v466 = vpop.f32.mrb[0].mxu0
        %v467 = vpop.f32.mrb[0].mxu0
        %v468 = vadd.f32 %v324, %v467
        %v469 = vpop.f32.mrb[0].mxu0
        %470 = vmatprep.mubr.bf16.mxu0 0
        %471 = vmatmul.mubr.bf16.gmra.mrb[0].mxu0 %v360
        %v472 = vpop.f32.mrb[0].mxu0
        %v473 = vadd.f32 %v324, %v472
        %v474 = vpop.f32.mrb[0].mxu0
        %v475 = vpop.f32.mrb[0].mxu0
        %v476 = vadd.f32 %v324, %v475
        %v477 = vpop.f32.mrb[0].mxu0
        %478 = vmatprep.mubr.bf16.mxu0 0
        %479 = vmatmul.mubr.bf16.gmra.mrb[0].mxu0 %v361
        %v480 = vpop.f32.mrb[0].mxu0
        %v481 = vadd.f32 %v324, %v480
        %v482 = vpop.f32.mrb[0].mxu0
        %v483 = vpop.f32.mrb[0].mxu0
        %v484 = vadd.f32 %v324, %v483
        %v485 = vpop.f32.mrb[0].mxu0
        %486 = vmatprep.mubr.bf16.mxu0 0
        %487 = vmatmul.mubr.bf16.gmra.mrb[0].mxu0 %v362
        %v488 = vpop.f32.mrb[0].mxu0
        %v489 = vadd.f32 %v324, %v488
        %v490 = vpop.f32.mrb[0].mxu0
        %v491 = vpop.f32.mrb[0].mxu0
        %v492 = vadd.f32 %v324, %v491
        %v493 = vpop.f32.mrb[0].mxu0
        %494 = vmatprep.mubr.bf16.mxu0 0
        %495 = vmatmul.mubr.bf16.gmra.mrb[0].mxu0 %v363
        %v496 = vpop.f32.mrb[0].mxu0
        %v497 = vadd.f32 %v324, %v496
        %v498 = vpop.f32.mrb[0].mxu0
        %v499 = vpop.f32.mrb[0].mxu0
        %v500 = vadd.f32 %v324, %v499
        %v501 = vpop.f32.mrb[0].mxu0
        %502 = vmatprep.mubr.bf16.mxu0 0
        %503 = vmatmul.mubr.bf16.gmra.mrb[0].mxu0 %v364
        %v504 = vpop.f32.mrb[0].mxu0
        %v505 = vadd.f32 %v324, %v504
        %v506 = vpop.f32.mrb[0].mxu0
        %v507 = vpop.f32.mrb[0].mxu0
        %v508 = vadd.f32 %v324, %v507
        %v509 = vpop.f32.mrb[0].mxu0
        %510 = vmatprep.mubr.bf16.mxu0 0
        %511 = vmatmul.mubr.bf16.gmra.mrb[0].mxu0 %v365
        %v512 = vpop.f32.mrb[0].mxu0
        %v513 = vadd.f32 %v324, %v512
        %v514 = vpop.f32.mrb[0].mxu0
        %v515 = vpop.f32.mrb[0].mxu0
        %v516 = vadd.f32 %v324, %v515
        %v517 = vpop.f32.mrb[0].mxu0
        %518 = vdwg.mxu0
        %v519 = vmul.f32 %v457, %v457
        %v520 = vmul.f32 %v460, %v460
        %v521 = vmul.f32 %v465, %v465
        %v522 = vmul.f32 %v468, %v468
        %v523 = vmul.f32 %v473, %v473
        %v524 = vmul.f32 %v476, %v476
        %v525 = vmul.f32 %v481, %v481
        %v526 = vmul.f32 %v484, %v484
        %v527 = vmul.f32 %v489, %v489
        %v528 = vmul.f32 %v492, %v492
        %v529 = vmul.f32 %v497, %v497
        %v530 = vmul.f32 %v500, %v500
        %v531 = vmul.f32 %v505, %v505
        %v532 = vmul.f32 %v508, %v508
        %v533 = vmul.f32 %v513, %v513
        %v534 = vmul.f32 %v516, %v516
        %v535 = vmul.f32 %v457, %v519
        %v536 = vmul.f32 %v460, %v520
        %v537 = vmul.f32 %v465, %v521
        %v538 = vmul.f32 %v468, %v522
        %v539 = vmul.f32 %v473, %v523
        %v540 = vmul.f32 %v476, %v524
        %v541 = vmul.f32 %v481, %v525
        %v542 = vmul.f32 %v484, %v526
        %v543 = vmul.f32 %v489, %v527
        %v544 = vmul.f32 %v492, %v528
        %v545 = vmul.f32 %v497, %v529
        %v546 = vmul.f32 %v500, %v530
        %v547 = vmul.f32 %v505, %v531
        %v548 = vmul.f32 %v508, %v532
        %v549 = vmul.f32 %v513, %v533
        %v550 = vmul.f32 %v516, %v534
        %v551 = vmul.f32 %v535, 0.044715
        %v552 = vmul.f32 %v536, 0.044715
        %v553 = vmul.f32 %v537, 0.044715
        %v554 = vmul.f32 %v538, 0.044715
        %v555 = vmul.f32 %v539, 0.044715
        %v556 = vmul.f32 %v540, 0.044715
        %v557 = vmul.f32 %v541, 0.044715
        %v558 = vmul.f32 %v542, 0.044715
        %v559 = vmul.f32 %v543, 0.044715
        %v560 = vmul.f32 %v544, 0.044715
        %v561 = vmul.f32 %v545, 0.044715
        %v562 = vmul.f32 %v546, 0.044715
        %v563 = vmul.f32 %v547, 0.044715
        %v564 = vmul.f32 %v548, 0.044715
        %v565 = vmul.f32 %v549, 0.044715
        %v566 = vmul.f32 %v550, 0.044715
        %v567 = vadd.f32 %v457, %v551
        %v568 = vadd.f32 %v460, %v552
        %v569 = vadd.f32 %v465, %v553
        %v570 = vadd.f32 %v468, %v554
        %v571 = vadd.f32 %v473, %v555
        %v572 = vadd.f32 %v476, %v556
        %v573 = vadd.f32 %v481, %v557
        %v574 = vadd.f32 %v484, %v558
        %v575 = vadd.f32 %v489, %v559
        %v576 = vadd.f32 %v492, %v560
        %v577 = vadd.f32 %v497, %v561
        %v578 = vadd.f32 %v500, %v562
        %v579 = vadd.f32 %v505, %v563
        %v580 = vadd.f32 %v508, %v564
        %v581 = vadd.f32 %v513, %v565
        %v582 = vadd.f32 %v516, %v566
        %v583 = vmul.f32 %v567, 0.7978846
        %v584 = vmul.f32 %v568, 0.7978846
        %v585 = vmul.f32 %v569, 0.7978846
        %v586 = vmul.f32 %v570, 0.7978846
        %v587 = vmul.f32 %v571, 0.7978846
        %v588 = vmul.f32 %v572, 0.7978846
        %v589 = vmul.f32 %v573, 0.7978846
        %v590 = vmul.f32 %v574, 0.7978846
        %v591 = vmul.f32 %v575, 0.7978846
        %v592 = vmul.f32 %v576, 0.7978846
        %v593 = vmul.f32 %v577, 0.7978846
        %v594 = vmul.f32 %v578, 0.7978846
        %v595 = vmul.f32 %v579, 0.7978846
        %v596 = vmul.f32 %v580, 0.7978846
        %v597 = vmul.f32 %v581, 0.7978846
        %v598 = vmul.f32 %v582, 0.7978846
        %v599 = vtanh.pop %v583
        %v600 = vtanh.pop %v584
        %v601 = vtanh.pop %v585
        %v602 = vtanh.pop %v586
        %v603 = vtanh.pop %v587
        %v604 = vtanh.pop %v588
        %v605 = vtanh.pop %v589
        %v606 = vtanh.pop %v590
        %v607 = vtanh.pop %v591
        %v608 = vtanh.pop %v592
        %v609 = vtanh.pop %v593
        %v610 = vtanh.pop %v594
        %v611 = vtanh.pop %v595
        %v612 = vtanh.pop %v596
        %v613 = vtanh.pop %v597
        %v614 = vtanh.pop %v598
        %v615 = vadd.f32 %v599, 1.0
        %v616 = vadd.f32 %v600, 1.0
        %v617 = vadd.f32 %v601, 1.0
        %v618 = vadd.f32 %v602, 1.0
        %v619 = vadd.f32 %v603, 1.0
        %v620 = vadd.f32 %v604, 1.0
        %v621 = vadd.f32 %v605, 1.0
        %v622 = vadd.f32 %v606, 1.0
        %v623 = vadd.f32 %v607, 1.0
        %v624 = vadd.f32 %v608, 1.0
        %v625 = vadd.f32 %v609, 1.0
        %v626 = vadd.f32 %v610, 1.0
        %v627 = vadd.f32 %v611, 1.0
        %v628 = vadd.f32 %v612, 1.0
        %v629 = vadd.f32 %v613, 1.0
        %v630 = vadd.f32 %v614, 1.0
        %v631 = vmul.f32 %v615, 0.5
        %v632 = vmul.f32 %v616, 0.5
        %v633 = vmul.f32 %v617, 0.5
        %v634 = vmul.f32 %v618, 0.5
        %v635 = vmul.f32 %v619, 0.5
        %v636 = vmul.f32 %v620, 0.5
        %v637 = vmul.f32 %v621, 0.5
        %v638 = vmul.f32 %v622, 0.5
        %v639 = vmul.f32 %v623, 0.5
        %v640 = vmul.f32 %v624, 0.5
        %v641 = vmul.f32 %v625, 0.5
        %v642 = vmul.f32 %v626, 0.5
        %v643 = vmul.f32 %v627, 0.5
        %v644 = vmul.f32 %v628, 0.5
        %v645 = vmul.f32 %v629, 0.5
        %v646 = vmul.f32 %v630, 0.5
        %v647 = vmul.f32 %v457, %v631
        %v648 = vmul.f32 %v460, %v632
        %v649 = vmul.f32 %v465, %v633
        %v650 = vmul.f32 %v468, %v634
        %v651 = vmul.f32 %v473, %v635
        %v652 = vmul.f32 %v476, %v636
        %v653 = vmul.f32 %v481, %v637
        %v654 = vmul.f32 %v484, %v638
        %v655 = vmul.f32 %v489, %v639
        %v656 = vmul.f32 %v492, %v640
        %v657 = vmul.f32 %v497, %v641
        %v658 = vmul.f32 %v500, %v642
        %v659 = vmul.f32 %v505, %v643
        %v660 = vmul.f32 %v508, %v644
        %v661 = vmul.f32 %v513, %v645
        %v662 = vmul.f32 %v516, %v646
        %v663 = vpack.c.bf16 %v648, %v647
        %v664 = vpack.c.bf16 %v650, %v649
        %v665 = vpack.c.bf16 %v652, %v651
        %v666 = vpack.c.bf16 %v654, %v653
        %v667 = vpack.c.bf16 %v656, %v655
        %v668 = vpack.c.bf16 %v658, %v657
        %v669 = vpack.c.bf16 %v660, %v659
        %v670 = vpack.c.bf16 %v662, %v661
        %v671 = vld [vmem:[#allocation7] sm:$0xf]
        %v672 = vld [vmem:[#allocation7 + $0x4] sm:$0xf]
        %v673 = vld [vmem:[#allocation7 + $0x8] sm:$0xf]
        %v674 = vld [vmem:[#allocation7 + $0xc] sm:$0xf]
        %v675 = vld [vmem:[#allocation7 + $0x10] sm:$0xf]
        %v676 = vld [vmem:[#allocation7 + $0x14] sm:$0xf]
        %v677 = vld [vmem:[#allocation7 + $0x18] sm:$0xf]
        %v678 = vld [vmem:[#allocation7 + $0x1c] sm:$0xf]
        %v679 = vld [vmem:[#allocation7 + $0x20] sm:$0xf]
        %v680 = vld [vmem:[#allocation7 + $0x24] sm:$0xf]
        %v681 = vld [vmem:[#allocation7 + $0x28] sm:$0xf]
        %v682 = vld [vmem:[#allocation7 + $0x2c] sm:$0xf]
        %v683 = vld [vmem:[#allocation7 + $0x30] sm:$0xf]
        %v684 = vld [vmem:[#allocation7 + $0x34] sm:$0xf]
        %v685 = vld [vmem:[#allocation7 + $0x38] sm:$0xf]
        %v686 = vld [vmem:[#allocation7 + $0x3c] sm:$0xf]
        %v703 = vunpack.c.l.b16 %v671
        %v704 = vunpack.c.l.b16 %v672
        %v705 = vunpack.c.l.b16 %v673
        %v706 = vunpack.c.l.b16 %v674
        %v707 = vunpack.c.l.b16 %v675
        %v708 = vunpack.c.l.b16 %v676
        %v709 = vunpack.c.l.b16 %v677
        %v710 = vunpack.c.l.b16 %v678
        %v711 = vunpack.c.l.b16 %v679
        %v712 = vunpack.c.l.b16 %v680
        %v713 = vunpack.c.l.b16 %v681
        %v714 = vunpack.c.l.b16 %v682
        %v715 = vunpack.c.l.b16 %v683
        %v716 = vunpack.c.l.b16 %v684
        %v717 = vunpack.c.l.b16 %v685
        %v718 = vunpack.c.l.b16 %v686
        %v719 = vpack.c.b16 %v704, %v703
        %v720 = vpack.c.b16 %v706, %v705
        %v721 = vpack.c.b16 %v708, %v707
        %v722 = vpack.c.b16 %v710, %v709
        %v723 = vpack.c.b16 %v712, %v711
        %v724 = vpack.c.b16 %v714, %v713
        %v725 = vpack.c.b16 %v716, %v715
        %v726 = vpack.c.b16 %v718, %v717
        %735 = vmatprep.subr.bf16.mxu0 0
        %736 = vmatpush1.bf16.msra.mxu0 %v719
        %737 = vmatprep.subr.bf16.mxu0 0
        %738 = vmatpush1.bf16.msra.mxu0 %v720
        %739 = vmatprep.subr.bf16.mxu0 0
        %740 = vmatpush1.bf16.msra.mxu0 %v721
        %741 = vmatprep.subr.bf16.mxu0 0
        %742 = vmatpush1.bf16.msra.mxu0 %v722
        %743 = vmatprep.subr.bf16.mxu0 0
        %744 = vmatpush1.bf16.msra.mxu0 %v723
        %745 = vmatprep.subr.bf16.mxu0 0
        %746 = vmatpush1.bf16.msra.mxu0 %v724
        %747 = vmatprep.subr.bf16.mxu0 0
        %748 = vmatpush1.bf16.msra.mxu0 %v725
        %749 = vmatprep.subr.bf16.mxu0 0
        %750 = vmatpush1.bf16.msra.mxu0 %v726
        %751 = vmatprep.subr.bf16.mxu0 0
        %752 = vmatpush1.bf16.msra.mxu0 0
        %753 = vmatprep.subr.bf16.mxu0 0
        %754 = vmatpush1.bf16.msra.mxu0 0
        %755 = vmatprep.subr.bf16.mxu0 0
        %756 = vmatpush1.bf16.msra.mxu0 0
        %757 = vmatprep.subr.bf16.mxu0 0
        %758 = vmatpush1.bf16.msra.mxu0 0
        %759 = vmatprep.subr.bf16.mxu0 0
        %760 = vmatpush1.bf16.msra.mxu0 0
        %761 = vmatprep.subr.bf16.mxu0 0
        %762 = vmatpush1.bf16.msra.mxu0 0
        %763 = vmatprep.subr.bf16.mxu0 0
        %764 = vmatpush1.bf16.msra.mxu0 0
        %765 = vmatprep.subr.bf16.mxu0 0
        %766 = vmatpush1.bf16.msra.mxu0 0
        %767 = vmatprep.mubr.bf16.mxu0 0
        %768 = vmatmul.mubr.bf16.gmra.mrb[0].mxu0 %v663
        %v769 = vpop.f32.mrb[0].mxu0
        %v770 = vadd.f32 0.0, %v769
        %v771 = vpop.f32.mrb[0].mxu0
        %v772 = vpop.f32.mrb[0].mxu0
        %v773 = vadd.f32 0.0, %v772
        %v774 = vpop.f32.mrb[0].mxu0
        %775 = vmatprep.mubr.bf16.mxu0 0
        %776 = vmatmul.mubr.bf16.gmra.mrb[0].mxu0 %v664
        %v777 = vpop.f32.mrb[0].mxu0
        %v778 = vadd.f32 0.0, %v777
        %v779 = vpop.f32.mrb[0].mxu0
        %v780 = vpop.f32.mrb[0].mxu0
        %v781 = vadd.f32 0.0, %v780
        %v782 = vpop.f32.mrb[0].mxu0
        %783 = vmatprep.mubr.bf16.mxu0 0
        %784 = vmatmul.mubr.bf16.gmra.mrb[0].mxu0 %v665
        %v785 = vpop.f32.mrb[0].mxu0
        %v786 = vadd.f32 0.0, %v785
        %v787 = vpop.f32.mrb[0].mxu0
        %v788 = vpop.f32.mrb[0].mxu0
        %v789 = vadd.f32 0.0, %v788
        %v790 = vpop.f32.mrb[0].mxu0
        %791 = vmatprep.mubr.bf16.mxu0 0
        %792 = vmatmul.mubr.bf16.gmra.mrb[0].mxu0 %v666
        %v793 = vpop.f32.mrb[0].mxu0
        %v794 = vadd.f32 0.0, %v793
        %v795 = vpop.f32.mrb[0].mxu0
        %v796 = vpop.f32.mrb[0].mxu0
        %v797 = vadd.f32 0.0, %v796
        %v798 = vpop.f32.mrb[0].mxu0
        %799 = vmatprep.mubr.bf16.mxu0 0
        %800 = vmatmul.mubr.bf16.gmra.mrb[0].mxu0 %v667
        %v801 = vpop.f32.mrb[0].mxu0
        %v802 = vadd.f32 0.0, %v801
        %v803 = vpop.f32.mrb[0].mxu0
        %v804 = vpop.f32.mrb[0].mxu0
        %v805 = vadd.f32 0.0, %v804
        %v806 = vpop.f32.mrb[0].mxu0
        %807 = vmatprep.mubr.bf16.mxu0 0
        %808 = vmatmul.mubr.bf16.gmra.mrb[0].mxu0 %v668
        %v809 = vpop.f32.mrb[0].mxu0
        %v810 = vadd.f32 0.0, %v809
        %v811 = vpop.f32.mrb[0].mxu0
        %v812 = vpop.f32.mrb[0].mxu0
        %v813 = vadd.f32 0.0, %v812
        %v814 = vpop.f32.mrb[0].mxu0
        %815 = vmatprep.mubr.bf16.mxu0 0
        %816 = vmatmul.mubr.bf16.gmra.mrb[0].mxu0 %v669
        %v817 = vpop.f32.mrb[0].mxu0
        %v818 = vadd.f32 0.0, %v817
        %v819 = vpop.f32.mrb[0].mxu0
        %v820 = vpop.f32.mrb[0].mxu0
        %v821 = vadd.f32 0.0, %v820
        %v822 = vpop.f32.mrb[0].mxu0
        %823 = vmatprep.mubr.bf16.mxu0 0
        %824 = vmatmul.mubr.bf16.gmra.mrb[0].mxu0 %v670
        %v825 = vpop.f32.mrb[0].mxu0
        %v826 = vadd.f32 0.0, %v825
        %v827 = vpop.f32.mrb[0].mxu0
        %v828 = vpop.f32.mrb[0].mxu0
        %v829 = vadd.f32 0.0, %v828
        %v830 = vpop.f32.mrb[0].mxu0
        %831 = vdwg.mxu0
        %v832 = vlaneseq
        %v833 = vand.u32 %v832, 127
        %vm834 = vcmp.lt.s32.totalorder %v833, 8
        %v835 = vsel %vm834, %v770, -1e+30
        %v836 = vsel %vm834, %v773, -1e+30
        %v837 = vsel %vm834, %v778, -1e+30
        %v838 = vsel %vm834, %v781, -1e+30
        %v839 = vsel %vm834, %v786, -1e+30
        %v840 = vsel %vm834, %v789, -1e+30
        %v841 = vsel %vm834, %v794, -1e+30
        %v842 = vsel %vm834, %v797, -1e+30
        %v843 = vsel %vm834, %v802, -1e+30
        %v844 = vsel %vm834, %v805, -1e+30
        %v845 = vsel %vm834, %v810, -1e+30
        %v846 = vsel %vm834, %v813, -1e+30
        %v847 = vsel %vm834, %v818, -1e+30
        %v848 = vsel %vm834, %v821, -1e+30
        %v849 = vsel %vm834, %v826, -1e+30
        %v850 = vsel %vm834, %v829, -1e+30
        %851 = vmax.xlane.f32.xlu0 %v835
        %v852 = vpop.xlane.xlu0 %851
        %853 = vmax.xlane.f32.xlu0 %v836
        %v854 = vpop.xlane.xlu0 %853
        %855 = vmax.xlane.f32.xlu0 %v837
        %v856 = vpop.xlane.xlu0 %855
        %857 = vmax.xlane.f32.xlu0 %v838
        %v858 = vpop.xlane.xlu0 %857
        %859 = vmax.xlane.f32.xlu0 %v839
        %v860 = vpop.xlane.xlu0 %859
        %861 = vmax.xlane.f32.xlu0 %v840
        %v862 = vpop.xlane.xlu0 %861
        %863 = vmax.xlane.f32.xlu0 %v841
        %v864 = vpop.xlane.xlu0 %863
        %865 = vmax.xlane.f32.xlu0 %v842
        %v866 = vpop.xlane.xlu0 %865
        %867 = vmax.xlane.f32.xlu0 %v843
        %v868 = vpop.xlane.xlu0 %867
        %869 = vmax.xlane.f32.xlu0 %v844
        %v870 = vpop.xlane.xlu0 %869
        %871 = vmax.xlane.f32.xlu0 %v845
        %v872 = vpop.xlane.xlu0 %871
        %873 = vmax.xlane.f32.xlu0 %v846
        %v874 = vpop.xlane.xlu0 %873
        %875 = vmax.xlane.f32.xlu0 %v847
        %v876 = vpop.xlane.xlu0 %875
        %877 = vmax.xlane.f32.xlu0 %v848
        %v878 = vpop.xlane.xlu0 %877
        %879 = vmax.xlane.f32.xlu0 %v849
        %v880 = vpop.xlane.xlu0 %879
        %881 = vmax.xlane.f32.xlu0 %v850
        %v882 = vpop.xlane.xlu0 %881
        %v883 = vsub.f32 %v835, %v852
        %v884 = vsub.f32 %v836, %v854
        %v885 = vsub.f32 %v837, %v856
        %v886 = vsub.f32 %v838, %v858
        %v887 = vsub.f32 %v839, %v860
        %v888 = vsub.f32 %v840, %v862
        %v889 = vsub.f32 %v841, %v864
        %v890 = vsub.f32 %v842, %v866
        %v891 = vsub.f32 %v843, %v868
        %v892 = vsub.f32 %v844, %v870
        %v893 = vsub.f32 %v845, %v872
        %v894 = vsub.f32 %v846, %v874
        %v895 = vsub.f32 %v847, %v876
        %v896 = vsub.f32 %v848, %v878
        %v897 = vsub.f32 %v849, %v880
        %v898 = vsub.f32 %v850, %v882
        %v899 = vmul.f32 %v883, 1.442695
        %v900 = vpow.pop %v899
        %v901 = vmul.f32 %v884, 1.442695
        %v902 = vpow.pop %v901
        %v903 = vmul.f32 %v885, 1.442695
        %v904 = vpow.pop %v903
        %v905 = vmul.f32 %v886, 1.442695
        %v906 = vpow.pop %v905
        %v907 = vmul.f32 %v887, 1.442695
        %v908 = vpow.pop %v907
        %v909 = vmul.f32 %v888, 1.442695
        %v910 = vpow.pop %v909
        %v911 = vmul.f32 %v889, 1.442695
        %v912 = vpow.pop %v911
        %v913 = vmul.f32 %v890, 1.442695
        %v914 = vpow.pop %v913
        %v915 = vmul.f32 %v891, 1.442695
        %v916 = vpow.pop %v915
        %v917 = vmul.f32 %v892, 1.442695
        %v918 = vpow.pop %v917
        %v919 = vmul.f32 %v893, 1.442695
        %v920 = vpow.pop %v919
        %v921 = vmul.f32 %v894, 1.442695
        %v922 = vpow.pop %v921
        %v923 = vmul.f32 %v895, 1.442695
        %v924 = vpow.pop %v923
        %v925 = vmul.f32 %v896, 1.442695
        %v926 = vpow.pop %v925
        %v927 = vmul.f32 %v897, 1.442695
        %v928 = vpow.pop %v927
        %v929 = vmul.f32 %v898, 1.442695
        %v930 = vpow.pop %v929
        %931 = vadd.xlane.f32.xlu0 %v900
        %v932 = vpop.xlane.xlu0 %931
        %933 = vadd.xlane.f32.xlu0 %v902
        %v934 = vpop.xlane.xlu0 %933
        %935 = vadd.xlane.f32.xlu0 %v904
        %v936 = vpop.xlane.xlu0 %935
        %937 = vadd.xlane.f32.xlu0 %v906
        %v938 = vpop.xlane.xlu0 %937
        %939 = vadd.xlane.f32.xlu0 %v908
        %v940 = vpop.xlane.xlu0 %939
        %941 = vadd.xlane.f32.xlu0 %v910
        %v942 = vpop.xlane.xlu0 %941
        %943 = vadd.xlane.f32.xlu0 %v912
        %v944 = vpop.xlane.xlu0 %943
        %945 = vadd.xlane.f32.xlu0 %v914
        %v946 = vpop.xlane.xlu0 %945
        %947 = vadd.xlane.f32.xlu0 %v916
        %v948 = vpop.xlane.xlu0 %947
        %949 = vadd.xlane.f32.xlu0 %v918
        %v950 = vpop.xlane.xlu0 %949
        %951 = vadd.xlane.f32.xlu0 %v920
        %v952 = vpop.xlane.xlu0 %951
        %953 = vadd.xlane.f32.xlu0 %v922
        %v954 = vpop.xlane.xlu0 %953
        %955 = vadd.xlane.f32.xlu0 %v924
        %v956 = vpop.xlane.xlu0 %955
        %957 = vadd.xlane.f32.xlu0 %v926
        %v958 = vpop.xlane.xlu0 %957
        %959 = vadd.xlane.f32.xlu0 %v928
        %v960 = vpop.xlane.xlu0 %959
        %961 = vadd.xlane.f32.xlu0 %v930
        %v962 = vpop.xlane.xlu0 %961
        %v963 = vrcp.pop %v932
        %v964 = vrcp.pop %v934
        %v965 = vrcp.pop %v936
        %v966 = vrcp.pop %v938
        %v967 = vrcp.pop %v940
        %v968 = vrcp.pop %v942
        %v969 = vrcp.pop %v944
        %v970 = vrcp.pop %v946
        %v971 = vrcp.pop %v948
        %v972 = vrcp.pop %v950
        %v973 = vrcp.pop %v952
        %v974 = vrcp.pop %v954
        %v975 = vrcp.pop %v956
        %v976 = vrcp.pop %v958
        %v977 = vrcp.pop %v960
        %v978 = vrcp.pop %v962
        %v979 = vmul.f32 %v900, %v963
        %v980 = vmul.f32 %v902, %v964
        %v981 = vmul.f32 %v904, %v965
        %v982 = vmul.f32 %v906, %v966
        %v983 = vmul.f32 %v908, %v967
        %v984 = vmul.f32 %v910, %v968
        %v985 = vmul.f32 %v912, %v969
        %v986 = vmul.f32 %v914, %v970
        %v987 = vmul.f32 %v916, %v971
        %v988 = vmul.f32 %v918, %v972
        %v989 = vmul.f32 %v920, %v973
        %v990 = vmul.f32 %v922, %v974
        %v991 = vmul.f32 %v924, %v975
        %v992 = vmul.f32 %v926, %v976
        %v993 = vmul.f32 %v928, %v977
        %v994 = vmul.f32 %v930, %v978
        %v995 = vpack.c.bf16 %v980, %v979
        %v996 = vpack.c.bf16 %v982, %v981
        %v997 = vpack.c.bf16 %v984, %v983
        %v998 = vpack.c.bf16 %v986, %v985
        %v999 = vpack.c.bf16 %v988, %v987
        %v1000 = vpack.c.bf16 %v990, %v989
        %v1001 = vpack.c.bf16 %v992, %v991
        %v1002 = vpack.c.bf16 %v994, %v993
        %v1011 = vunpack.c.l.b16 %v995
        %v1012 = vunpack.c.h.b16 %v995
        %v1013 = vunpack.c.l.b16 %v996
        %v1014 = vunpack.c.h.b16 %v996
        %v1015 = vunpack.c.l.b16 %v997
        %v1016 = vunpack.c.h.b16 %v997
        %v1017 = vunpack.c.l.b16 %v998
        %v1018 = vunpack.c.h.b16 %v998
        %v1019 = vunpack.c.l.b16 %v999
        %v1020 = vunpack.c.h.b16 %v999
        %v1021 = vunpack.c.l.b16 %v1000
        %v1022 = vunpack.c.h.b16 %v1000
        %v1023 = vunpack.c.l.b16 %v1001
        %v1024 = vunpack.c.h.b16 %v1001
        %v1025 = vunpack.c.l.b16 %v1002
        %v1026 = vunpack.c.h.b16 %v1002
        %v1027 = vpack.c.b16 %v1011, %v1011
        %v1028 = vpack.c.b16 %v1012, %v1012
        %v1029 = vpack.c.b16 %v1013, %v1013
        %v1030 = vpack.c.b16 %v1014, %v1014
        %v1031 = vpack.c.b16 %v1015, %v1015
        %v1032 = vpack.c.b16 %v1016, %v1016
        %v1033 = vpack.c.b16 %v1017, %v1017
        %v1034 = vpack.c.b16 %v1018, %v1018
        %v1035 = vpack.c.b16 %v1019, %v1019
        %v1036 = vpack.c.b16 %v1020, %v1020
        %v1037 = vpack.c.b16 %v1021, %v1021
        %v1038 = vpack.c.b16 %v1022, %v1022
        %v1039 = vpack.c.b16 %v1023, %v1023
        %v1040 = vpack.c.b16 %v1024, %v1024
        %v1041 = vpack.c.b16 %v1025, %v1025
        %v1042 = vpack.c.b16 %v1026, %v1026
        %1059 = vst [vmem:[%s275] sm:$0xf] %v1027
        %1060 = vst [vmem:[%s275 + $0x4] sm:$0xf] %v1028
        %1061 = vst [vmem:[%s275 + $0x8] sm:$0xf] %v1029
        %1062 = vst [vmem:[%s275 + $0xc] sm:$0xf] %v1030
        %1063 = vst [vmem:[%s275 + $0x10] sm:$0xf] %v1031
        %1064 = vst [vmem:[%s275 + $0x14] sm:$0xf] %v1032
        %1065 = vst [vmem:[%s275 + $0x18] sm:$0xf] %v1033
        %1066 = vst [vmem:[%s275 + $0x1c] sm:$0xf] %v1034
        %1067 = vst [vmem:[%s275 + $0x20] sm:$0xf] %v1035
        %1068 = vst [vmem:[%s275 + $0x24] sm:$0xf] %v1036
        %1069 = vst [vmem:[%s275 + $0x28] sm:$0xf] %v1037
        %1070 = vst [vmem:[%s275 + $0x2c] sm:$0xf] %v1038
        %1071 = vst [vmem:[%s275 + $0x30] sm:$0xf] %v1039
        %1072 = vst [vmem:[%s275 + $0x34] sm:$0xf] %v1040
        %1073 = vst [vmem:[%s275 + $0x38] sm:$0xf] %v1041
        %1074 = vst [vmem:[%s275 + $0x3c] sm:$0xf] %v1042
        %1075 = vmax.xlane.f32.xlu0 %v979
        %v1076 = vpop.xlane.xlu0 %1075
        %1077 = vmax.xlane.f32.xlu0 %v980
        %v1078 = vpop.xlane.xlu0 %1077
        %1079 = vmax.xlane.f32.xlu0 %v981
        %v1080 = vpop.xlane.xlu0 %1079
        %1081 = vmax.xlane.f32.xlu0 %v982
        %v1082 = vpop.xlane.xlu0 %1081
        %1083 = vmax.xlane.f32.xlu0 %v983
        %v1084 = vpop.xlane.xlu0 %1083
        %1085 = vmax.xlane.f32.xlu0 %v984
        %v1086 = vpop.xlane.xlu0 %1085
        %1087 = vmax.xlane.f32.xlu0 %v985
        %v1088 = vpop.xlane.xlu0 %1087
        %1089 = vmax.xlane.f32.xlu0 %v986
        %v1090 = vpop.xlane.xlu0 %1089
        %1091 = vmax.xlane.f32.xlu0 %v987
        %v1092 = vpop.xlane.xlu0 %1091
        %1093 = vmax.xlane.f32.xlu0 %v988
        %v1094 = vpop.xlane.xlu0 %1093
        %1095 = vmax.xlane.f32.xlu0 %v989
        %v1096 = vpop.xlane.xlu0 %1095
        %1097 = vmax.xlane.f32.xlu0 %v990
        %v1098 = vpop.xlane.xlu0 %1097
        %1099 = vmax.xlane.f32.xlu0 %v991
        %v1100 = vpop.xlane.xlu0 %1099
        %1101 = vmax.xlane.f32.xlu0 %v992
        %v1102 = vpop.xlane.xlu0 %1101
        %1103 = vmax.xlane.f32.xlu0 %v993
        %v1104 = vpop.xlane.xlu0 %1103
        %1105 = vmax.xlane.f32.xlu0 %v994
        %v1106 = vpop.xlane.xlu0 %1105
        %vm1107 = vcmp.eq.f32.partialorder %v979, %v1076
        %vm1108 = vcmp.eq.f32.partialorder %v980, %v1078
        %vm1109 = vcmp.eq.f32.partialorder %v981, %v1080
        %vm1110 = vcmp.eq.f32.partialorder %v982, %v1082
        %vm1111 = vcmp.eq.f32.partialorder %v983, %v1084
        %vm1112 = vcmp.eq.f32.partialorder %v984, %v1086
        %vm1113 = vcmp.eq.f32.partialorder %v985, %v1088
        %vm1114 = vcmp.eq.f32.partialorder %v986, %v1090
        %vm1115 = vcmp.eq.f32.partialorder %v987, %v1092
        %vm1116 = vcmp.eq.f32.partialorder %v988, %v1094
        %vm1117 = vcmp.eq.f32.partialorder %v989, %v1096
        %vm1118 = vcmp.eq.f32.partialorder %v990, %v1098
        %vm1119 = vcmp.eq.f32.partialorder %v991, %v1100
        %vm1120 = vcmp.eq.f32.partialorder %v992, %v1102
        %vm1121 = vcmp.eq.f32.partialorder %v993, %v1104
        %vm1122 = vcmp.eq.f32.partialorder %v994, %v1106
        %v1123 = vsel %vm1107, %v833, 128
        %v1124 = vsel %vm1108, %v833, 128
        %v1125 = vsel %vm1109, %v833, 128
        %v1126 = vsel %vm1110, %v833, 128
        %v1127 = vsel %vm1111, %v833, 128
        %v1128 = vsel %vm1112, %v833, 128
        %v1129 = vsel %vm1113, %v833, 128
        %v1130 = vsel %vm1114, %v833, 128
        %v1131 = vsel %vm1115, %v833, 128
        %v1132 = vsel %vm1116, %v833, 128
        %v1133 = vsel %vm1117, %v833, 128
        %v1134 = vsel %vm1118, %v833, 128
        %v1135 = vsel %vm1119, %v833, 128
        %v1136 = vsel %vm1120, %v833, 128
        %v1137 = vsel %vm1121, %v833, 128
        %v1138 = vsel %vm1122, %v833, 128
        %v1139 = vand.u32 %v1123, 65535
        %v1140 = vshra.s32 %v1123, 16
        %v1141 = vcvt.s32.f32 %v1139
        %v1142 = vcvt.s32.f32 %v1140
        %1143 = vmin.xlane.f32.xlu0 %v1142
        %v1144 = vpop.xlane.xlu0 %1143
        %vm1145 = vcmp.eq.f32.partialorder %v1142, %v1144
        %v1146 = vsel %vm1145, %v1141, inf
        %1147 = vmin.xlane.f32.xlu0 %v1146
        %v1148 = vpop.xlane.xlu0 %1147
        %v1149 = vcvt.f32.s32 %v1148
        %v1150 = vcvt.f32.s32 %v1144
        %v1151 = vshll.u32 %v1150, 16
        %v1152 = vadd.s32 %v1151, %v1149
        %v1153 = vand.u32 %v1124, 65535
        %v1154 = vshra.s32 %v1124, 16
        %v1155 = vcvt.s32.f32 %v1153
        %v1156 = vcvt.s32.f32 %v1154
        %1157 = vmin.xlane.f32.xlu0 %v1156
        %v1158 = vpop.xlane.xlu0 %1157
        %vm1159 = vcmp.eq.f32.partialorder %v1156, %v1158
        %v1160 = vsel %vm1159, %v1155, inf
        %1161 = vmin.xlane.f32.xlu0 %v1160
        %v1162 = vpop.xlane.xlu0 %1161
        %v1163 = vcvt.f32.s32 %v1162
        %v1164 = vcvt.f32.s32 %v1158
        %v1165 = vshll.u32 %v1164, 16
        %v1166 = vadd.s32 %v1165, %v1163
        %v1167 = vand.u32 %v1125, 65535
        %v1168 = vshra.s32 %v1125, 16
        %v1169 = vcvt.s32.f32 %v1167
        %v1170 = vcvt.s32.f32 %v1168
        %1171 = vmin.xlane.f32.xlu0 %v1170
        %v1172 = vpop.xlane.xlu0 %1171
        %vm1173 = vcmp.eq.f32.partialorder %v1170, %v1172
        %v1174 = vsel %vm1173, %v1169, inf
        %1175 = vmin.xlane.f32.xlu0 %v1174
        %v1176 = vpop.xlane.xlu0 %1175
        %v1177 = vcvt.f32.s32 %v1176
        %v1178 = vcvt.f32.s32 %v1172
        %v1179 = vshll.u32 %v1178, 16
        %v1180 = vadd.s32 %v1179, %v1177
        %v1181 = vand.u32 %v1126, 65535
        %v1182 = vshra.s32 %v1126, 16
        %v1183 = vcvt.s32.f32 %v1181
        %v1184 = vcvt.s32.f32 %v1182
        %1185 = vmin.xlane.f32.xlu0 %v1184
        %v1186 = vpop.xlane.xlu0 %1185
        %vm1187 = vcmp.eq.f32.partialorder %v1184, %v1186
        %v1188 = vsel %vm1187, %v1183, inf
        %1189 = vmin.xlane.f32.xlu0 %v1188
        %v1190 = vpop.xlane.xlu0 %1189
        %v1191 = vcvt.f32.s32 %v1190
        %v1192 = vcvt.f32.s32 %v1186
        %v1193 = vshll.u32 %v1192, 16
        %v1194 = vadd.s32 %v1193, %v1191
        %v1195 = vand.u32 %v1127, 65535
        %v1196 = vshra.s32 %v1127, 16
        %v1197 = vcvt.s32.f32 %v1195
        %v1198 = vcvt.s32.f32 %v1196
        %1199 = vmin.xlane.f32.xlu0 %v1198
        %v1200 = vpop.xlane.xlu0 %1199
        %vm1201 = vcmp.eq.f32.partialorder %v1198, %v1200
        %v1202 = vsel %vm1201, %v1197, inf
        %1203 = vmin.xlane.f32.xlu0 %v1202
        %v1204 = vpop.xlane.xlu0 %1203
        %v1205 = vcvt.f32.s32 %v1204
        %v1206 = vcvt.f32.s32 %v1200
        %v1207 = vshll.u32 %v1206, 16
        %v1208 = vadd.s32 %v1207, %v1205
        %v1209 = vand.u32 %v1128, 65535
        %v1210 = vshra.s32 %v1128, 16
        %v1211 = vcvt.s32.f32 %v1209
        %v1212 = vcvt.s32.f32 %v1210
        %1213 = vmin.xlane.f32.xlu0 %v1212
        %v1214 = vpop.xlane.xlu0 %1213
        %vm1215 = vcmp.eq.f32.partialorder %v1212, %v1214
        %v1216 = vsel %vm1215, %v1211, inf
        %1217 = vmin.xlane.f32.xlu0 %v1216
        %v1218 = vpop.xlane.xlu0 %1217
        %v1219 = vcvt.f32.s32 %v1218
        %v1220 = vcvt.f32.s32 %v1214
        %v1221 = vshll.u32 %v1220, 16
        %v1222 = vadd.s32 %v1221, %v1219
        %v1223 = vand.u32 %v1129, 65535
        %v1224 = vshra.s32 %v1129, 16
        %v1225 = vcvt.s32.f32 %v1223
        %v1226 = vcvt.s32.f32 %v1224
        %1227 = vmin.xlane.f32.xlu0 %v1226
        %v1228 = vpop.xlane.xlu0 %1227
        %vm1229 = vcmp.eq.f32.partialorder %v1226, %v1228
        %v1230 = vsel %vm1229, %v1225, inf
        %1231 = vmin.xlane.f32.xlu0 %v1230
        %v1232 = vpop.xlane.xlu0 %1231
        %v1233 = vcvt.f32.s32 %v1232
        %v1234 = vcvt.f32.s32 %v1228
        %v1235 = vshll.u32 %v1234, 16
        %v1236 = vadd.s32 %v1235, %v1233
        %v1237 = vand.u32 %v1130, 65535
        %v1238 = vshra.s32 %v1130, 16
        %v1239 = vcvt.s32.f32 %v1237
        %v1240 = vcvt.s32.f32 %v1238
        %1241 = vmin.xlane.f32.xlu0 %v1240
        %v1242 = vpop.xlane.xlu0 %1241
        %vm1243 = vcmp.eq.f32.partialorder %v1240, %v1242
        %v1244 = vsel %vm1243, %v1239, inf
        %1245 = vmin.xlane.f32.xlu0 %v1244
        %v1246 = vpop.xlane.xlu0 %1245
        %v1247 = vcvt.f32.s32 %v1246
        %v1248 = vcvt.f32.s32 %v1242
        %v1249 = vshll.u32 %v1248, 16
        %v1250 = vadd.s32 %v1249, %v1247
        %v1251 = vand.u32 %v1131, 65535
        %v1252 = vshra.s32 %v1131, 16
        %v1253 = vcvt.s32.f32 %v1251
        %v1254 = vcvt.s32.f32 %v1252
        %1255 = vmin.xlane.f32.xlu0 %v1254
        %v1256 = vpop.xlane.xlu0 %1255
        %vm1257 = vcmp.eq.f32.partialorder %v1254, %v1256
        %v1258 = vsel %vm1257, %v1253, inf
        %1259 = vmin.xlane.f32.xlu0 %v1258
        %v1260 = vpop.xlane.xlu0 %1259
        %v1261 = vcvt.f32.s32 %v1260
        %v1262 = vcvt.f32.s32 %v1256
        %v1263 = vshll.u32 %v1262, 16
        %v1264 = vadd.s32 %v1263, %v1261
        %v1265 = vand.u32 %v1132, 65535
        %v1266 = vshra.s32 %v1132, 16
        %v1267 = vcvt.s32.f32 %v1265
        %v1268 = vcvt.s32.f32 %v1266
        %1269 = vmin.xlane.f32.xlu0 %v1268
        %v1270 = vpop.xlane.xlu0 %1269
        %vm1271 = vcmp.eq.f32.partialorder %v1268, %v1270
        %v1272 = vsel %vm1271, %v1267, inf
        %1273 = vmin.xlane.f32.xlu0 %v1272
        %v1274 = vpop.xlane.xlu0 %1273
        %v1275 = vcvt.f32.s32 %v1274
        %v1276 = vcvt.f32.s32 %v1270
        %v1277 = vshll.u32 %v1276, 16
        %v1278 = vadd.s32 %v1277, %v1275
        %v1279 = vand.u32 %v1133, 65535
        %v1280 = vshra.s32 %v1133, 16
        %v1281 = vcvt.s32.f32 %v1279
        %v1282 = vcvt.s32.f32 %v1280
        %1283 = vmin.xlane.f32.xlu0 %v1282
        %v1284 = vpop.xlane.xlu0 %1283
        %vm1285 = vcmp.eq.f32.partialorder %v1282, %v1284
        %v1286 = vsel %vm1285, %v1281, inf
        %1287 = vmin.xlane.f32.xlu0 %v1286
        %v1288 = vpop.xlane.xlu0 %1287
        %v1289 = vcvt.f32.s32 %v1288
        %v1290 = vcvt.f32.s32 %v1284
        %v1291 = vshll.u32 %v1290, 16
        %v1292 = vadd.s32 %v1291, %v1289
        %v1293 = vand.u32 %v1134, 65535
        %v1294 = vshra.s32 %v1134, 16
        %v1295 = vcvt.s32.f32 %v1293
        %v1296 = vcvt.s32.f32 %v1294
        %1297 = vmin.xlane.f32.xlu0 %v1296
        %v1298 = vpop.xlane.xlu0 %1297
        %vm1299 = vcmp.eq.f32.partialorder %v1296, %v1298
        %v1300 = vsel %vm1299, %v1295, inf
        %1301 = vmin.xlane.f32.xlu0 %v1300
        %v1302 = vpop.xlane.xlu0 %1301
        %v1303 = vcvt.f32.s32 %v1302
        %v1304 = vcvt.f32.s32 %v1298
        %v1305 = vshll.u32 %v1304, 16
        %v1306 = vadd.s32 %v1305, %v1303
        %v1307 = vand.u32 %v1135, 65535
        %v1308 = vshra.s32 %v1135, 16
        %v1309 = vcvt.s32.f32 %v1307
        %v1310 = vcvt.s32.f32 %v1308
        %1311 = vmin.xlane.f32.xlu0 %v1310
        %v1312 = vpop.xlane.xlu0 %1311
        %vm1313 = vcmp.eq.f32.partialorder %v1310, %v1312
        %v1314 = vsel %vm1313, %v1309, inf
        %1315 = vmin.xlane.f32.xlu0 %v1314
        %v1316 = vpop.xlane.xlu0 %1315
        %v1317 = vcvt.f32.s32 %v1316
        %v1318 = vcvt.f32.s32 %v1312
        %v1319 = vshll.u32 %v1318, 16
        %v1320 = vadd.s32 %v1319, %v1317
        %v1321 = vand.u32 %v1136, 65535
        %v1322 = vshra.s32 %v1136, 16
        %v1323 = vcvt.s32.f32 %v1321
        %v1324 = vcvt.s32.f32 %v1322
        %1325 = vmin.xlane.f32.xlu0 %v1324
        %v1326 = vpop.xlane.xlu0 %1325
        %vm1327 = vcmp.eq.f32.partialorder %v1324, %v1326
        %v1328 = vsel %vm1327, %v1323, inf
        %1329 = vmin.xlane.f32.xlu0 %v1328
        %v1330 = vpop.xlane.xlu0 %1329
        %v1331 = vcvt.f32.s32 %v1330
        %v1332 = vcvt.f32.s32 %v1326
        %v1333 = vshll.u32 %v1332, 16
        %v1334 = vadd.s32 %v1333, %v1331
        %v1335 = vand.u32 %v1137, 65535
        %v1336 = vshra.s32 %v1137, 16
        %v1337 = vcvt.s32.f32 %v1335
        %v1338 = vcvt.s32.f32 %v1336
        %1339 = vmin.xlane.f32.xlu0 %v1338
        %v1340 = vpop.xlane.xlu0 %1339
        %vm1341 = vcmp.eq.f32.partialorder %v1338, %v1340
        %v1342 = vsel %vm1341, %v1337, inf
        %1343 = vmin.xlane.f32.xlu0 %v1342
        %v1344 = vpop.xlane.xlu0 %1343
        %v1345 = vcvt.f32.s32 %v1344
        %v1346 = vcvt.f32.s32 %v1340
        %v1347 = vshll.u32 %v1346, 16
        %v1348 = vadd.s32 %v1347, %v1345
        %v1349 = vand.u32 %v1138, 65535
        %v1350 = vshra.s32 %v1138, 16
        %v1351 = vcvt.s32.f32 %v1349
        %v1352 = vcvt.s32.f32 %v1350
        %1353 = vmin.xlane.f32.xlu0 %v1352
        %v1354 = vpop.xlane.xlu0 %1353
        %vm1355 = vcmp.eq.f32.partialorder %v1352, %v1354
        %v1356 = vsel %vm1355, %v1351, inf
        %1357 = vmin.xlane.f32.xlu0 %v1356
        %v1358 = vpop.xlane.xlu0 %1357
        %v1359 = vcvt.f32.s32 %v1358
        %v1360 = vcvt.f32.s32 %v1354
        %v1361 = vshll.u32 %v1360, 16
        %v1362 = vadd.s32 %v1361, %v1359
        %vm1363 = vcmp.eq.s32.totalorder %v833, 0
        %v1364 = vsel %vm1363, %v1076, 0.0
        %v1365 = vsel %vm1363, %v1078, 0.0
        %v1366 = vsel %vm1363, %v1080, 0.0
        %v1367 = vsel %vm1363, %v1082, 0.0
        %v1368 = vsel %vm1363, %v1084, 0.0
        %v1369 = vsel %vm1363, %v1086, 0.0
        %v1370 = vsel %vm1363, %v1088, 0.0
        %v1371 = vsel %vm1363, %v1090, 0.0
        %v1372 = vsel %vm1363, %v1092, 0.0
        %v1373 = vsel %vm1363, %v1094, 0.0
        %v1374 = vsel %vm1363, %v1096, 0.0
        %v1375 = vsel %vm1363, %v1098, 0.0
        %v1376 = vsel %vm1363, %v1100, 0.0
        %v1377 = vsel %vm1363, %v1102, 0.0
        %v1378 = vsel %vm1363, %v1104, 0.0
        %v1379 = vsel %vm1363, %v1106, 0.0
        %vm1380 = vcmp.eq.s32.totalorder %v833, 2
        %v1381 = vcvt.s32.f32 %v1152
        %v1382 = vcvt.s32.f32 %v1166
        %v1383 = vcvt.s32.f32 %v1180
        %v1384 = vcvt.s32.f32 %v1194
        %v1385 = vcvt.s32.f32 %v1208
        %v1386 = vcvt.s32.f32 %v1222
        %v1387 = vcvt.s32.f32 %v1236
        %v1388 = vcvt.s32.f32 %v1250
        %v1389 = vcvt.s32.f32 %v1264
        %v1390 = vcvt.s32.f32 %v1278
        %v1391 = vcvt.s32.f32 %v1292
        %v1392 = vcvt.s32.f32 %v1306
        %v1393 = vcvt.s32.f32 %v1320
        %v1394 = vcvt.s32.f32 %v1334
        %v1395 = vcvt.s32.f32 %v1348
        %v1396 = vcvt.s32.f32 %v1362
        %v1397 = vsel %vm1380, %v1381, %v1364
        %v1398 = vsel %vm1380, %v1382, %v1365
        %v1399 = vsel %vm1380, %v1383, %v1366
        %v1400 = vsel %vm1380, %v1384, %v1367
        %v1401 = vsel %vm1380, %v1385, %v1368
        %v1402 = vsel %vm1380, %v1386, %v1369
        %v1403 = vsel %vm1380, %v1387, %v1370
        %v1404 = vsel %vm1380, %v1388, %v1371
        %v1405 = vsel %vm1380, %v1389, %v1372
        %v1406 = vsel %vm1380, %v1390, %v1373
        %v1407 = vsel %vm1380, %v1391, %v1374
        %v1408 = vsel %vm1380, %v1392, %v1375
        %v1409 = vsel %vm1380, %v1393, %v1376
        %v1410 = vsel %vm1380, %v1394, %v1377
        %v1411 = vsel %vm1380, %v1395, %v1378
        %v1412 = vsel %vm1380, %v1396, %v1379
        %vm1413 = vcmp.eq.s32.totalorder %v833, %v1152
        %vm1414 = vcmp.eq.s32.totalorder %v833, %v1166
        %vm1415 = vcmp.eq.s32.totalorder %v833, %v1180
        %vm1416 = vcmp.eq.s32.totalorder %v833, %v1194
        %vm1417 = vcmp.eq.s32.totalorder %v833, %v1208
        %vm1418 = vcmp.eq.s32.totalorder %v833, %v1222
        %vm1419 = vcmp.eq.s32.totalorder %v833, %v1236
        %vm1420 = vcmp.eq.s32.totalorder %v833, %v1250
        %vm1421 = vcmp.eq.s32.totalorder %v833, %v1264
        %vm1422 = vcmp.eq.s32.totalorder %v833, %v1278
        %vm1423 = vcmp.eq.s32.totalorder %v833, %v1292
        %vm1424 = vcmp.eq.s32.totalorder %v833, %v1306
        %vm1425 = vcmp.eq.s32.totalorder %v833, %v1320
        %vm1426 = vcmp.eq.s32.totalorder %v833, %v1334
        %vm1427 = vcmp.eq.s32.totalorder %v833, %v1348
        %vm1428 = vcmp.eq.s32.totalorder %v833, %v1362
        %v1429 = vsel %vm1413, -1.0, %v979
        %v1430 = vsel %vm1414, -1.0, %v980
        %v1431 = vsel %vm1415, -1.0, %v981
        %v1432 = vsel %vm1416, -1.0, %v982
        %v1433 = vsel %vm1417, -1.0, %v983
        %v1434 = vsel %vm1418, -1.0, %v984
        %v1435 = vsel %vm1419, -1.0, %v985
        %v1436 = vsel %vm1420, -1.0, %v986
        %v1437 = vsel %vm1421, -1.0, %v987
        %v1438 = vsel %vm1422, -1.0, %v988
        %v1439 = vsel %vm1423, -1.0, %v989
        %v1440 = vsel %vm1424, -1.0, %v990
        %v1441 = vsel %vm1425, -1.0, %v991
        %v1442 = vsel %vm1426, -1.0, %v992
        %v1443 = vsel %vm1427, -1.0, %v993
        %v1444 = vsel %vm1428, -1.0, %v994
        %1445 = vmax.xlane.f32.xlu0 %v1429
        %v1446 = vpop.xlane.xlu0 %1445
        %1447 = vmax.xlane.f32.xlu0 %v1430
        %v1448 = vpop.xlane.xlu0 %1447
        %1449 = vmax.xlane.f32.xlu0 %v1431
        %v1450 = vpop.xlane.xlu0 %1449
        %1451 = vmax.xlane.f32.xlu0 %v1432
        %v1452 = vpop.xlane.xlu0 %1451
        %1453 = vmax.xlane.f32.xlu0 %v1433
        %v1454 = vpop.xlane.xlu0 %1453
        %1455 = vmax.xlane.f32.xlu0 %v1434
        %v1456 = vpop.xlane.xlu0 %1455
        %1457 = vmax.xlane.f32.xlu0 %v1435
        %v1458 = vpop.xlane.xlu0 %1457
        %1459 = vmax.xlane.f32.xlu0 %v1436
        %v1460 = vpop.xlane.xlu0 %1459
        %1461 = vmax.xlane.f32.xlu0 %v1437
        %v1462 = vpop.xlane.xlu0 %1461
        %1463 = vmax.xlane.f32.xlu0 %v1438
        %v1464 = vpop.xlane.xlu0 %1463
        %1465 = vmax.xlane.f32.xlu0 %v1439
        %v1466 = vpop.xlane.xlu0 %1465
        %1467 = vmax.xlane.f32.xlu0 %v1440
        %v1468 = vpop.xlane.xlu0 %1467
        %1469 = vmax.xlane.f32.xlu0 %v1441
        %v1470 = vpop.xlane.xlu0 %1469
        %1471 = vmax.xlane.f32.xlu0 %v1442
        %v1472 = vpop.xlane.xlu0 %1471
        %1473 = vmax.xlane.f32.xlu0 %v1443
        %v1474 = vpop.xlane.xlu0 %1473
        %1475 = vmax.xlane.f32.xlu0 %v1444
        %v1476 = vpop.xlane.xlu0 %1475
        %vm1477 = vcmp.eq.f32.partialorder %v1429, %v1446
        %vm1478 = vcmp.eq.f32.partialorder %v1430, %v1448
        %vm1479 = vcmp.eq.f32.partialorder %v1431, %v1450
        %vm1480 = vcmp.eq.f32.partialorder %v1432, %v1452
        %vm1481 = vcmp.eq.f32.partialorder %v1433, %v1454
        %vm1482 = vcmp.eq.f32.partialorder %v1434, %v1456
        %vm1483 = vcmp.eq.f32.partialorder %v1435, %v1458
        %vm1484 = vcmp.eq.f32.partialorder %v1436, %v1460
        %vm1485 = vcmp.eq.f32.partialorder %v1437, %v1462
        %vm1486 = vcmp.eq.f32.partialorder %v1438, %v1464
        %vm1487 = vcmp.eq.f32.partialorder %v1439, %v1466
        %vm1488 = vcmp.eq.f32.partialorder %v1440, %v1468
        %vm1489 = vcmp.eq.f32.partialorder %v1441, %v1470
        %vm1490 = vcmp.eq.f32.partialorder %v1442, %v1472
        %vm1491 = vcmp.eq.f32.partialorder %v1443, %v1474
        %vm1492 = vcmp.eq.f32.partialorder %v1444, %v1476
        %v1493 = vsel %vm1477, %v833, 128
        %v1494 = vsel %vm1478, %v833, 128
        %v1495 = vsel %vm1479, %v833, 128
        %v1496 = vsel %vm1480, %v833, 128
        %v1497 = vsel %vm1481, %v833, 128
        %v1498 = vsel %vm1482, %v833, 128
        %v1499 = vsel %vm1483, %v833, 128
        %v1500 = vsel %vm1484, %v833, 128
        %v1501 = vsel %vm1485, %v833, 128
        %v1502 = vsel %vm1486, %v833, 128
        %v1503 = vsel %vm1487, %v833, 128
        %v1504 = vsel %vm1488, %v833, 128
        %v1505 = vsel %vm1489, %v833, 128
        %v1506 = vsel %vm1490, %v833, 128
        %v1507 = vsel %vm1491, %v833, 128
        %v1508 = vsel %vm1492, %v833, 128
        %v1509 = vand.u32 %v1493, 65535
        %v1510 = vshra.s32 %v1493, 16
        %v1511 = vcvt.s32.f32 %v1509
        %v1512 = vcvt.s32.f32 %v1510
        %1513 = vmin.xlane.f32.xlu0 %v1512
        %v1514 = vpop.xlane.xlu0 %1513
        %vm1515 = vcmp.eq.f32.partialorder %v1512, %v1514
        %v1516 = vsel %vm1515, %v1511, inf
        %1517 = vmin.xlane.f32.xlu0 %v1516
        %v1518 = vpop.xlane.xlu0 %1517
        %v1519 = vcvt.f32.s32 %v1518
        %v1520 = vcvt.f32.s32 %v1514
        %v1521 = vshll.u32 %v1520, 16
        %v1522 = vadd.s32 %v1521, %v1519
        %v1523 = vand.u32 %v1494, 65535
        %v1524 = vshra.s32 %v1494, 16
        %v1525 = vcvt.s32.f32 %v1523
        %v1526 = vcvt.s32.f32 %v1524
        %1527 = vmin.xlane.f32.xlu0 %v1526
        %v1528 = vpop.xlane.xlu0 %1527
        %vm1529 = vcmp.eq.f32.partialorder %v1526, %v1528
        %v1530 = vsel %vm1529, %v1525, inf
        %1531 = vmin.xlane.f32.xlu0 %v1530
        %v1532 = vpop.xlane.xlu0 %1531
        %v1533 = vcvt.f32.s32 %v1532
        %v1534 = vcvt.f32.s32 %v1528
        %v1535 = vshll.u32 %v1534, 16
        %v1536 = vadd.s32 %v1535, %v1533
        %v1537 = vand.u32 %v1495, 65535
        %v1538 = vshra.s32 %v1495, 16
        %v1539 = vcvt.s32.f32 %v1537
        %v1540 = vcvt.s32.f32 %v1538
        %1541 = vmin.xlane.f32.xlu0 %v1540
        %v1542 = vpop.xlane.xlu0 %1541
        %vm1543 = vcmp.eq.f32.partialorder %v1540, %v1542
        %v1544 = vsel %vm1543, %v1539, inf
        %1545 = vmin.xlane.f32.xlu0 %v1544
        %v1546 = vpop.xlane.xlu0 %1545
        %v1547 = vcvt.f32.s32 %v1546
        %v1548 = vcvt.f32.s32 %v1542
        %v1549 = vshll.u32 %v1548, 16
        %v1550 = vadd.s32 %v1549, %v1547
        %v1551 = vand.u32 %v1496, 65535
        %v1552 = vshra.s32 %v1496, 16
        %v1553 = vcvt.s32.f32 %v1551
        %v1554 = vcvt.s32.f32 %v1552
        %1555 = vmin.xlane.f32.xlu0 %v1554
        %v1556 = vpop.xlane.xlu0 %1555
        %vm1557 = vcmp.eq.f32.partialorder %v1554, %v1556
        %v1558 = vsel %vm1557, %v1553, inf
        %1559 = vmin.xlane.f32.xlu0 %v1558
        %v1560 = vpop.xlane.xlu0 %1559
        %v1561 = vcvt.f32.s32 %v1560
        %v1562 = vcvt.f32.s32 %v1556
        %v1563 = vshll.u32 %v1562, 16
        %v1564 = vadd.s32 %v1563, %v1561
        %v1565 = vand.u32 %v1497, 65535
        %v1566 = vshra.s32 %v1497, 16
        %v1567 = vcvt.s32.f32 %v1565
        %v1568 = vcvt.s32.f32 %v1566
        %1569 = vmin.xlane.f32.xlu0 %v1568
        %v1570 = vpop.xlane.xlu0 %1569
        %vm1571 = vcmp.eq.f32.partialorder %v1568, %v1570
        %v1572 = vsel %vm1571, %v1567, inf
        %1573 = vmin.xlane.f32.xlu0 %v1572
        %v1574 = vpop.xlane.xlu0 %1573
        %v1575 = vcvt.f32.s32 %v1574
        %v1576 = vcvt.f32.s32 %v1570
        %v1577 = vshll.u32 %v1576, 16
        %v1578 = vadd.s32 %v1577, %v1575
        %v1579 = vand.u32 %v1498, 65535
        %v1580 = vshra.s32 %v1498, 16
        %v1581 = vcvt.s32.f32 %v1579
        %v1582 = vcvt.s32.f32 %v1580
        %1583 = vmin.xlane.f32.xlu0 %v1582
        %v1584 = vpop.xlane.xlu0 %1583
        %vm1585 = vcmp.eq.f32.partialorder %v1582, %v1584
        %v1586 = vsel %vm1585, %v1581, inf
        %1587 = vmin.xlane.f32.xlu0 %v1586
        %v1588 = vpop.xlane.xlu0 %1587
        %v1589 = vcvt.f32.s32 %v1588
        %v1590 = vcvt.f32.s32 %v1584
        %v1591 = vshll.u32 %v1590, 16
        %v1592 = vadd.s32 %v1591, %v1589
        %v1593 = vand.u32 %v1499, 65535
        %v1594 = vshra.s32 %v1499, 16
        %v1595 = vcvt.s32.f32 %v1593
        %v1596 = vcvt.s32.f32 %v1594
        %1597 = vmin.xlane.f32.xlu0 %v1596
        %v1598 = vpop.xlane.xlu0 %1597
        %vm1599 = vcmp.eq.f32.partialorder %v1596, %v1598
        %v1600 = vsel %vm1599, %v1595, inf
        %1601 = vmin.xlane.f32.xlu0 %v1600
        %v1602 = vpop.xlane.xlu0 %1601
        %v1603 = vcvt.f32.s32 %v1602
        %v1604 = vcvt.f32.s32 %v1598
        %v1605 = vshll.u32 %v1604, 16
        %v1606 = vadd.s32 %v1605, %v1603
        %v1607 = vand.u32 %v1500, 65535
        %v1608 = vshra.s32 %v1500, 16
        %v1609 = vcvt.s32.f32 %v1607
        %v1610 = vcvt.s32.f32 %v1608
        %1611 = vmin.xlane.f32.xlu0 %v1610
        %v1612 = vpop.xlane.xlu0 %1611
        %vm1613 = vcmp.eq.f32.partialorder %v1610, %v1612
        %v1614 = vsel %vm1613, %v1609, inf
        %1615 = vmin.xlane.f32.xlu0 %v1614
        %v1616 = vpop.xlane.xlu0 %1615
        %v1617 = vcvt.f32.s32 %v1616
        %v1618 = vcvt.f32.s32 %v1612
        %v1619 = vshll.u32 %v1618, 16
        %v1620 = vadd.s32 %v1619, %v1617
        %v1621 = vand.u32 %v1501, 65535
        %v1622 = vshra.s32 %v1501, 16
        %v1623 = vcvt.s32.f32 %v1621
        %v1624 = vcvt.s32.f32 %v1622
        %1625 = vmin.xlane.f32.xlu0 %v1624
        %v1626 = vpop.xlane.xlu0 %1625
        %vm1627 = vcmp.eq.f32.partialorder %v1624, %v1626
        %v1628 = vsel %vm1627, %v1623, inf
        %1629 = vmin.xlane.f32.xlu0 %v1628
        %v1630 = vpop.xlane.xlu0 %1629
        %v1631 = vcvt.f32.s32 %v1630
        %v1632 = vcvt.f32.s32 %v1626
        %v1633 = vshll.u32 %v1632, 16
        %v1634 = vadd.s32 %v1633, %v1631
        %v1635 = vand.u32 %v1502, 65535
        %v1636 = vshra.s32 %v1502, 16
        %v1637 = vcvt.s32.f32 %v1635
        %v1638 = vcvt.s32.f32 %v1636
        %1639 = vmin.xlane.f32.xlu0 %v1638
        %v1640 = vpop.xlane.xlu0 %1639
        %vm1641 = vcmp.eq.f32.partialorder %v1638, %v1640
        %v1642 = vsel %vm1641, %v1637, inf
        %1643 = vmin.xlane.f32.xlu0 %v1642
        %v1644 = vpop.xlane.xlu0 %1643
        %v1645 = vcvt.f32.s32 %v1644
        %v1646 = vcvt.f32.s32 %v1640
        %v1647 = vshll.u32 %v1646, 16
        %v1648 = vadd.s32 %v1647, %v1645
        %v1649 = vand.u32 %v1503, 65535
        %v1650 = vshra.s32 %v1503, 16
        %v1651 = vcvt.s32.f32 %v1649
        %v1652 = vcvt.s32.f32 %v1650
        %1653 = vmin.xlane.f32.xlu0 %v1652
        %v1654 = vpop.xlane.xlu0 %1653
        %vm1655 = vcmp.eq.f32.partialorder %v1652, %v1654
        %v1656 = vsel %vm1655, %v1651, inf
        %1657 = vmin.xlane.f32.xlu0 %v1656
        %v1658 = vpop.xlane.xlu0 %1657
        %v1659 = vcvt.f32.s32 %v1658
        %v1660 = vcvt.f32.s32 %v1654
        %v1661 = vshll.u32 %v1660, 16
        %v1662 = vadd.s32 %v1661, %v1659
        %v1663 = vand.u32 %v1504, 65535
        %v1664 = vshra.s32 %v1504, 16
        %v1665 = vcvt.s32.f32 %v1663
        %v1666 = vcvt.s32.f32 %v1664
        %1667 = vmin.xlane.f32.xlu0 %v1666
        %v1668 = vpop.xlane.xlu0 %1667
        %vm1669 = vcmp.eq.f32.partialorder %v1666, %v1668
        %v1670 = vsel %vm1669, %v1665, inf
        %1671 = vmin.xlane.f32.xlu0 %v1670
        %v1672 = vpop.xlane.xlu0 %1671
        %v1673 = vcvt.f32.s32 %v1672
        %v1674 = vcvt.f32.s32 %v1668
        %v1675 = vshll.u32 %v1674, 16
        %v1676 = vadd.s32 %v1675, %v1673
        %v1677 = vand.u32 %v1505, 65535
        %v1678 = vshra.s32 %v1505, 16
        %v1679 = vcvt.s32.f32 %v1677
        %v1680 = vcvt.s32.f32 %v1678
        %1681 = vmin.xlane.f32.xlu0 %v1680
        %v1682 = vpop.xlane.xlu0 %1681
        %vm1683 = vcmp.eq.f32.partialorder %v1680, %v1682
        %v1684 = vsel %vm1683, %v1679, inf
        %1685 = vmin.xlane.f32.xlu0 %v1684
        %v1686 = vpop.xlane.xlu0 %1685
        %v1687 = vcvt.f32.s32 %v1686
        %v1688 = vcvt.f32.s32 %v1682
        %v1689 = vshll.u32 %v1688, 16
        %v1690 = vadd.s32 %v1689, %v1687
        %v1691 = vand.u32 %v1506, 65535
        %v1692 = vshra.s32 %v1506, 16
        %v1693 = vcvt.s32.f32 %v1691
        %v1694 = vcvt.s32.f32 %v1692
        %1695 = vmin.xlane.f32.xlu0 %v1694
        %v1696 = vpop.xlane.xlu0 %1695
        %vm1697 = vcmp.eq.f32.partialorder %v1694, %v1696
        %v1698 = vsel %vm1697, %v1693, inf
        %1699 = vmin.xlane.f32.xlu0 %v1698
        %v1700 = vpop.xlane.xlu0 %1699
        %v1701 = vcvt.f32.s32 %v1700
        %v1702 = vcvt.f32.s32 %v1696
        %v1703 = vshll.u32 %v1702, 16
        %v1704 = vadd.s32 %v1703, %v1701
        %v1705 = vand.u32 %v1507, 65535
        %v1706 = vshra.s32 %v1507, 16
        %v1707 = vcvt.s32.f32 %v1705
        %v1708 = vcvt.s32.f32 %v1706
        %1709 = vmin.xlane.f32.xlu0 %v1708
        %v1710 = vpop.xlane.xlu0 %1709
        %vm1711 = vcmp.eq.f32.partialorder %v1708, %v1710
        %v1712 = vsel %vm1711, %v1707, inf
        %1713 = vmin.xlane.f32.xlu0 %v1712
        %v1714 = vpop.xlane.xlu0 %1713
        %v1715 = vcvt.f32.s32 %v1714
        %v1716 = vcvt.f32.s32 %v1710
        %v1717 = vshll.u32 %v1716, 16
        %v1718 = vadd.s32 %v1717, %v1715
        %v1719 = vand.u32 %v1508, 65535
        %v1720 = vshra.s32 %v1508, 16
        %v1721 = vcvt.s32.f32 %v1719
        %v1722 = vcvt.s32.f32 %v1720
        %1723 = vmin.xlane.f32.xlu0 %v1722
        %v1724 = vpop.xlane.xlu0 %1723
        %vm1725 = vcmp.eq.f32.partialorder %v1722, %v1724
        %v1726 = vsel %vm1725, %v1721, inf
        %1727 = vmin.xlane.f32.xlu0 %v1726
        %v1728 = vpop.xlane.xlu0 %1727
        %v1729 = vcvt.f32.s32 %v1728
        %v1730 = vcvt.f32.s32 %v1724
        %v1731 = vshll.u32 %v1730, 16
        %v1732 = vadd.s32 %v1731, %v1729
        %vm1733 = vcmp.eq.s32.totalorder %v833, 1
        %v1734 = vsel %vm1733, %v1446, %v1397
        %v1735 = vsel %vm1733, %v1448, %v1398
        %v1736 = vsel %vm1733, %v1450, %v1399
        %v1737 = vsel %vm1733, %v1452, %v1400
        %v1738 = vsel %vm1733, %v1454, %v1401
        %v1739 = vsel %vm1733, %v1456, %v1402
        %v1740 = vsel %vm1733, %v1458, %v1403
        %v1741 = vsel %vm1733, %v1460, %v1404
        %v1742 = vsel %vm1733, %v1462, %v1405
        %v1743 = vsel %vm1733, %v1464, %v1406
        %v1744 = vsel %vm1733, %v1466, %v1407
        %v1745 = vsel %vm1733, %v1468, %v1408
        %v1746 = vsel %vm1733, %v1470, %v1409
        %v1747 = vsel %vm1733, %v1472, %v1410
        %v1748 = vsel %vm1733, %v1474, %v1411
        %v1749 = vsel %vm1733, %v1476, %v1412
        %vm1750 = vcmp.eq.s32.totalorder %v833, 3
        %v1751 = vcvt.s32.f32 %v1522
        %v1752 = vcvt.s32.f32 %v1536
        %v1753 = vcvt.s32.f32 %v1550
        %v1754 = vcvt.s32.f32 %v1564
        %v1755 = vcvt.s32.f32 %v1578
        %v1756 = vcvt.s32.f32 %v1592
        %v1757 = vcvt.s32.f32 %v1606
        %v1758 = vcvt.s32.f32 %v1620
        %v1759 = vcvt.s32.f32 %v1634
        %v1760 = vcvt.s32.f32 %v1648
        %v1761 = vcvt.s32.f32 %v1662
        %v1762 = vcvt.s32.f32 %v1676
        %v1763 = vcvt.s32.f32 %v1690
        %v1764 = vcvt.s32.f32 %v1704
        %v1765 = vcvt.s32.f32 %v1718
        %v1766 = vcvt.s32.f32 %v1732
        %v1767 = vsel %vm1750, %v1751, %v1734
        %v1768 = vsel %vm1750, %v1752, %v1735
        %v1769 = vsel %vm1750, %v1753, %v1736
        %v1770 = vsel %vm1750, %v1754, %v1737
        %v1771 = vsel %vm1750, %v1755, %v1738
        %v1772 = vsel %vm1750, %v1756, %v1739
        %v1773 = vsel %vm1750, %v1757, %v1740
        %v1774 = vsel %vm1750, %v1758, %v1741
        %v1775 = vsel %vm1750, %v1759, %v1742
        %v1776 = vsel %vm1750, %v1760, %v1743
        %v1777 = vsel %vm1750, %v1761, %v1744
        %v1778 = vsel %vm1750, %v1762, %v1745
        %v1779 = vsel %vm1750, %v1763, %v1746
        %v1780 = vsel %vm1750, %v1764, %v1747
        %v1781 = vsel %vm1750, %v1765, %v1748
        %v1782 = vsel %vm1750, %v1766, %v1749
        %1783 = vst [vmem:[%s282] sm:$0xff] %v1767
        %1784 = vst [vmem:[%s282 + $0x8] sm:$0xff] %v1768
        %1785 = vst [vmem:[%s282 + $0x10] sm:$0xff] %v1769
        %1786 = vst [vmem:[%s282 + $0x18] sm:$0xff] %v1770
        %1787 = vst [vmem:[%s282 + $0x20] sm:$0xff] %v1771
        %1788 = vst [vmem:[%s282 + $0x28] sm:$0xff] %v1772
        %1789 = vst [vmem:[%s282 + $0x30] sm:$0xff] %v1773
        %1790 = vst [vmem:[%s282 + $0x38] sm:$0xff] %v1774
        %1791 = vst [vmem:[%s282 + $0x40] sm:$0xff] %v1775
        %1792 = vst [vmem:[%s282 + $0x48] sm:$0xff] %v1776
        %1793 = vst [vmem:[%s282 + $0x50] sm:$0xff] %v1777
        %1794 = vst [vmem:[%s282 + $0x58] sm:$0xff] %v1778
        %1795 = vst [vmem:[%s282 + $0x60] sm:$0xff] %v1779
        %1796 = vst [vmem:[%s282 + $0x68] sm:$0xff] %v1780
        %1797 = vst [vmem:[%s282 + $0x70] sm:$0xff] %v1781
        %1798 = vst [vmem:[%s282 + $0x78] sm:$0xff] %v1782
        %s1799 = sand.u32 %s124, 1
        %s1800 = scalar_lea.sflag [#allocation4], %s1799
        %s1801 = sand.u32 %s124, 1
        %s1802 = smul.addr %s1801, 64
        %s1803 = scalar_lea.vmem [#allocation8], %s1802
        %s1804 = sand.u32 %s150, 1
        %s1805 = scalar_lea.sflag [#allocation10], %s1804
        %s1806 = sand.u32 %s150, 1
        %s1807 = smul.addr %s1806, 128
        %s1808 = scalar_lea.vmem [#allocation9], %s1807
        // Predicated region
        $region49: #{tpu_custom_call.1} parent=35 // pred_check
          %p1809 = pneg %p134
        $region50: #{tpu_custom_call.1} parent=35 // pred_check_branch
          %1811 = sbr.rel (%p1809) target = $region52
        $region51: #{tpu_custom_call.1} parent=35 // pred_region
          %s1812 = smul.u32 16, %s27
          %s1814 = ssub.s32 1024, 1024
          %1815 = vsyncadd %s1800, %s1814
          %s1816 = smul.addr %s1812, 64
          %s1817 = scalar_lea.hbm %s4, %s1816
          %s1818 = sshll.u32 %s1803, 4
          %s1819 = int_to_ptr.vmem [resolvable:$true] %s1818
          %1824 = dma.vmem_to_hbm [thread:$0]  %s1819, 1024, %s1817, %s1800, 64, 64, 4
        $region52: #{tpu_custom_call.1} parent=35 // pred_fallthru
          _
        // Predicated region
        $region53: #{tpu_custom_call.1} parent=35 // pred_check
          %p1825 = pneg %p160
        $region54: #{tpu_custom_call.1} parent=35 // pred_check_branch
          %1827 = sbr.rel (%p1825) target = $region56
        $region55: #{tpu_custom_call.1} parent=35 // pred_region
          %s1828 = smul.u32 16, %s27
          %s1830 = ssub.s32 2048, 2048
          %1831 = vsyncadd %s1805, %s1830
          %s1832 = smul.addr %s1828, 128
          %s1833 = scalar_lea.hbm %s5, %s1832
          %s1834 = sshll.u32 %s1808, 4
          %s1835 = int_to_ptr.vmem [resolvable:$true] %s1834
          %1840 = dma.vmem_to_hbm [thread:$0]  %s1835, 2048, %s1833, %s1805, 128, 128, 8
        $region56: #{tpu_custom_call.1} parent=35 // pred_fallthru
          _
      $region36: #{tpu_custom_call.1} parent=5 // pred_fallthru
        _
      %p1841 = scmp.le.s32.totalorder 2, %s22
      // Predicated region
      $region57: #{tpu_custom_call.1} parent=5 // pred_check
        %p1842 = pneg %p1841
      $region58: #{tpu_custom_call.1} parent=5 // pred_check_branch
        %1844 = sbr.rel (%p1842) target = $region60
      $region59: #{tpu_custom_call.1} parent=5 // pred_region
        %s1845 = ssub.s32 %s22, 2
        // Predicated region
        $region61: #{tpu_custom_call.1} parent=59 // pred_check
          %p1846 = pneg %p140
        $region62: #{tpu_custom_call.1} parent=59 // pred_check_branch
          %1848 = sbr.rel (%p1846) target = $region64
        $region63: #{tpu_custom_call.1} parent=59 // pred_region
          %s1849 = sand.u32 %s125, 1
          %s1850 = scalar_lea.sflag [#allocation4], %s1849
          %s1851 = sand.u32 %s125, 1
          %s1852 = smul.addr %s1851, 64
          %s1853 = scalar_lea.vmem [#allocation8], %s1852
          %1854 = dma.done %s1850, 1024
        $region64: #{tpu_custom_call.1} parent=59 // pred_fallthru
          _
        // Predicated region
        $region65: #{tpu_custom_call.1} parent=59 // pred_check
          %p1855 = pneg %p166
        $region66: #{tpu_custom_call.1} parent=59 // pred_check_branch
          %1857 = sbr.rel (%p1855) target = $region68
        $region67: #{tpu_custom_call.1} parent=59 // pred_region
          %s1858 = sand.u32 %s151, 1
          %s1859 = scalar_lea.sflag [#allocation10], %s1858
          %s1860 = sand.u32 %s151, 1
          %s1861 = smul.addr %s1860, 128
          %s1862 = scalar_lea.vmem [#allocation9], %s1861
          %1863 = dma.done %s1859, 2048
        $region68: #{tpu_custom_call.1} parent=59 // pred_fallthru
          _
      $region60: #{tpu_custom_call.1} parent=5 // pred_fallthru
        _
    $region6: #{tpu_custom_call.1} parent=1 // loop_footer
      %s26 = sadd.s32 1, %s22
    $region7: #{tpu_custom_call.1} parent=1 // loop_footer_branch
      %21 = sbr.rel target = $region3
    $region8: #{tpu_custom_call.1} parent=1 // loop_exit
      _
    %1864 = vsyncpa [#allocation3], 1
    %s1865 = scalar_lea.sflag [#allocation3], 1
    %1866 = vsyncpa %s1865, 1
    %1867 = vsyncpa [#allocation6], 1
    %1868 = vsyncpa [#allocation4], 1
    %s1869 = scalar_lea.sflag [#allocation4], 1
    %1870 = vsyncpa %s1869, 1
    %1871 = vsyncpa [#allocation10], 1
    %s1872 = scalar_lea.sflag [#allocation10], 1
    %1873 = vsyncpa %s1872, 1

</llo_original>
